<compile_context>
chip_gen: v7x
topology: tpu7x:2x2x1
jax: 0.10.0
libtpu: 0.0.40
codegen_flags: <defaults>
</compile_context>

<pallas_src>
import jax
import jax.numpy as jnp
from jax.experimental import pallas as pl
from jax.experimental.pallas import tpu as pltpu

LANE = 128
SUBLANE = 8


def _round_up(n, m):
    return (n + m - 1) // m * m


def _autoencoder_kernel(x_ref,
                        w1, b1, w2, b2, w3, b3, w4, b4,
                        w5, b5, w6, b6, w7, b7, w8, b8,
                        out_ref):
    """All 8 Linear layers + activations fused, operating on one (TILE_B, D) batch tile.

    Weights arrive pre-transposed to (in_pad, out_pad) with zero padding to 128-lane
    hidden widths; biases are (1, out_pad)."""

    def lin(h, w_ref, b_ref):
        return jnp.dot(h, w_ref[...], preferred_element_type=jnp.float32) + b_ref[...]

    # bf16 stream from HBM, f32 math inside the kernel.
    h = x_ref[...].astype(jnp.float32)

    # encoder
    h = jnp.maximum(lin(h, w1, b1), 0.0)   # Linear(D, 20)  + ReLU   (padded to 128)
    h = jnp.maximum(lin(h, w2, b2), 0.0)   # Linear(20, 15) + ReLU   (padded to 128)
    h = jnp.maximum(lin(h, w3, b3), 0.0)   # Linear(15, 12) + ReLU   (padded to 128)
    h = lin(h, w4, b4)                     # Linear(12, Z)  (no activation, padded)

    # decoder
    h = jnp.maximum(lin(h, w5, b5), 0.0)   # Linear(Z, 12)  + ReLU   (padded to 128)
    h = jnp.maximum(lin(h, w6, b6), 0.0)   # Linear(12, 15) + ReLU   (padded to 128)
    h = jnp.maximum(lin(h, w7, b7), 0.0)   # Linear(15, 20) + ReLU   (padded to 128)
    out_ref[...] = jnp.tanh(lin(h, w8, b8)).astype(out_ref.dtype)   # Linear(20, D) + Tanh


def autoencoder_forward(x, params, *, tile_b=512, input_dtype=jnp.bfloat16):
    """x: (B, original_dim) float32. params: list of (W, b) in PyTorch layout
    (W: (out, in), b: (out,)). Returns (B, original_dim) float32.

    tile_b: batch tile (sweep 512-2048 on v6e/v7x; 512-1024 on v5e)."""
    B, D = x.shape
    n_layers = len(params)

    # ---- parameter prep (plain JAX glue) --------------------------------------
    # Layer widths, with hidden widths padded to 128 lanes; external dims stay exact.
    widths = [D] + [int(W.shape[0]) for W, _ in params]          # PyTorch W is (out, in)
    pwidths = [widths[0]] + [_round_up(w, LANE) for w in widths[1:-1]] + [widths[-1]]

    flat_args = []
    for li, (W, b) in enumerate(params):
        in_p, out_p = pwidths[li], pwidths[li + 1]
        Wt = jnp.asarray(W, jnp.float32).T                        # (in, out)
        Wt = jnp.pad(Wt, ((0, in_p - Wt.shape[0]), (0, out_p - Wt.shape[1])))
        bb = jnp.pad(jnp.asarray(b, jnp.float32), (0, out_p - b.shape[0]))[None, :]
        flat_args.append(Wt)                                      # (in_pad, out_pad)
        flat_args.append(bb)                                      # (1, out_pad)

    # ---- batch tiling ----------------------------------------------------------
    tile_b = min(tile_b, _round_up(B, SUBLANE))
    B_pad = _round_up(B, tile_b)
    x_p = x.astype(input_dtype)
    if B_pad != B:
        x_p = jnp.pad(x_p, ((0, B_pad - B), (0, 0)))
    grid = (B_pad // tile_b,)

    in_specs = [pl.BlockSpec((tile_b, D), lambda i: (i, 0))]      # streamed input tile
    for a in flat_args:                                           # resident params
        in_specs.append(pl.BlockSpec(a.shape, lambda i: (0, 0)))
    out_spec = pl.BlockSpec((tile_b, D), lambda i: (i, 0))        # streamed output tile

    flops = 2 * B_pad * sum(pwidths[i] * pwidths[i + 1] for i in range(n_layers))
    bytes_accessed = (x_p.size * jnp.dtype(input_dtype).itemsize  # input stream
                      + B_pad * D * 4                             # output stream (f32)
                      + sum(int(a.size) * 4 for a in flat_args))  # resident params

    out = pl.pallas_call(
        _autoencoder_kernel,
        out_shape=jax.ShapeDtypeStruct((B_pad, D), jnp.float32),
        grid=grid,
        in_specs=in_specs,
        out_specs=out_spec,
        compiler_params=pltpu.CompilerParams(
            dimension_semantics=("parallel",)),                   # megacore on v7x
        cost_estimate=pl.CostEstimate(
            flops=flops,
            transcendentals=B_pad * D,                            # tanh
            bytes_accessed=bytes_accessed),
    )(x_p, *flat_args)

    return out[:B]


def init_params(key, original_dim, intermediate_dim):
    """Deterministic init matching PyTorch nn.Linear default:
    U(-1/sqrt(fan_in), 1/sqrt(fan_in)) for both weight and bias."""
    dims = [
        (original_dim, 20), (20, 15), (15, 12), (12, intermediate_dim),   # encoder
        (intermediate_dim, 12), (12, 15), (15, 20), (20, original_dim),   # decoder
    ]
    params = []
    for (fan_in, fan_out) in dims:
        key, kw, kb = jax.random.split(key, 3)
        bound = 1.0 / (fan_in ** 0.5)
        W = jax.random.uniform(kw, (fan_out, fan_in), jnp.float32, -bound, bound)
        b = jax.random.uniform(kb, (fan_out,), jnp.float32, -bound, bound)
        params.append((W, b))
    return params


def _reference_forward(x, params):
    """Pure-JAX reference (mirrors the PyTorch forward) for a sanity check."""
    h = x
    acts = ["relu", "relu", "relu", None, "relu", "relu", "relu", "tanh"]
    for (W, b), a in zip(params, acts):
        h = h @ W.T + b
        if a == "relu":
            h = jnp.maximum(h, 0.0)
        elif a == "tanh":
            h = jnp.tanh(h)
    return h


if __name__ == "__main__":
    original_dim = 16
    intermediate_dim = 8
    batch = 256            # small, but big enough to exercise the batch grid
    tile_b = 128           # -> grid=(2,): double-buffered streaming + resident weights

    key = jax.random.PRNGKey(0)
    key, kx = jax.random.split(key)
    x = jax.random.normal(kx, (batch, original_dim), jnp.float32)

    params = init_params(key, original_dim, intermediate_dim)

    out = autoencoder_forward(x, params, tile_b=tile_b)
    out = jax.block_until_ready(out)

    # Reference consumes the same bf16-rounded input the kernel streams from HBM.
    x_rounded = x.astype(jnp.bfloat16).astype(jnp.float32)
    ref = _reference_forward(x_rounded, params)

    assert out.shape == (batch, original_dim)
    assert jnp.allclose(out, ref, atol=1e-3, rtol=1e-3), "mismatch vs reference"

    print("KERNEL_OK")
</pallas_src>

<mosaic_0001>
module attributes {stable_mosaic.version = 11 : i64} {
  func.func @_autoencoder_kernel(%arg0: i32, %arg1: memref<128x16xbf16, #tpu.memory_space<vmem>>, %arg2: memref<16x128xf32, #tpu.memory_space<vmem>>, %arg3: memref<1x128xf32, #tpu.memory_space<vmem>>, %arg4: memref<128x128xf32, #tpu.memory_space<vmem>>, %arg5: memref<1x128xf32, #tpu.memory_space<vmem>>, %arg6: memref<128x128xf32, #tpu.memory_space<vmem>>, %arg7: memref<1x128xf32, #tpu.memory_space<vmem>>, %arg8: memref<128x128xf32, #tpu.memory_space<vmem>>, %arg9: memref<1x128xf32, #tpu.memory_space<vmem>>, %arg10: memref<128x128xf32, #tpu.memory_space<vmem>>, %arg11: memref<1x128xf32, #tpu.memory_space<vmem>>, %arg12: memref<128x128xf32, #tpu.memory_space<vmem>>, %arg13: memref<1x128xf32, #tpu.memory_space<vmem>>, %arg14: memref<128x128xf32, #tpu.memory_space<vmem>>, %arg15: memref<1x128xf32, #tpu.memory_space<vmem>>, %arg16: memref<128x16xf32, #tpu.memory_space<vmem>>, %arg17: memref<1x16xf32, #tpu.memory_space<vmem>>, %arg18: memref<128x16xf32, #tpu.memory_space<vmem>>) attributes {dimension_semantics = [#tpu.dimension_semantics<parallel>], iteration_bounds = array<i64: 2>, scalar_prefetch = 0 : i64, scratch_operands = 0 : i64, tpu.core_type = #tpu.core_type<tc>, window_params = [{transform_indices = @transform_0, window_bounds = array<i64: 128, 16>}, {pipeline_mode = #tpu.pipeline_mode<synchronous>, transform_indices = @transform_1, window_bounds = array<i64: 16, 128>}, {pipeline_mode = #tpu.pipeline_mode<synchronous>, transform_indices = @transform_2, window_bounds = array<i64: 1, 128>}, {pipeline_mode = #tpu.pipeline_mode<synchronous>, transform_indices = @transform_3, window_bounds = array<i64: 128, 128>}, {pipeline_mode = #tpu.pipeline_mode<synchronous>, transform_indices = @transform_4, window_bounds = array<i64: 1, 128>}, {pipeline_mode = #tpu.pipeline_mode<synchronous>, transform_indices = @transform_5, window_bounds = array<i64: 128, 128>}, {pipeline_mode = #tpu.pipeline_mode<synchronous>, transform_indices = @transform_6, window_bounds = array<i64: 1, 128>}, {pipeline_mode = #tpu.pipeline_mode<synchronous>, transform_indices = @transform_7, window_bounds = array<i64: 128, 128>}, {pipeline_mode = #tpu.pipeline_mode<synchronous>, transform_indices = @transform_8, window_bounds = array<i64: 1, 128>}, {pipeline_mode = #tpu.pipeline_mode<synchronous>, transform_indices = @transform_9, window_bounds = array<i64: 128, 128>}, {pipeline_mode = #tpu.pipeline_mode<synchronous>, transform_indices = @transform_10, window_bounds = array<i64: 1, 128>}, {pipeline_mode = #tpu.pipeline_mode<synchronous>, transform_indices = @transform_11, window_bounds = array<i64: 128, 128>}, {pipeline_mode = #tpu.pipeline_mode<synchronous>, transform_indices = @transform_12, window_bounds = array<i64: 1, 128>}, {pipeline_mode = #tpu.pipeline_mode<synchronous>, transform_indices = @transform_13, window_bounds = array<i64: 128, 128>}, {pipeline_mode = #tpu.pipeline_mode<synchronous>, transform_indices = @transform_14, window_bounds = array<i64: 1, 128>}, {pipeline_mode = #tpu.pipeline_mode<synchronous>, transform_indices = @transform_15, window_bounds = array<i64: 128, 16>}, {pipeline_mode = #tpu.pipeline_mode<synchronous>, transform_indices = @transform_16, window_bounds = array<i64: 1, 16>}, {transform_indices = @transform_17, window_bounds = array<i64: 128, 16>}]} {
    %c0 = arith.constant 0 : index
    %c0_0 = arith.constant 0 : index
    %0 = vector.load %arg1[%c0, %c0_0] : memref<128x16xbf16, #tpu.memory_space<vmem>>, vector<128x16xbf16>
    %1 = arith.extf %0 : vector<128x16xbf16> to vector<128x16xf32>
    %c0_1 = arith.constant 0 : index
    %c0_2 = arith.constant 0 : index
    %2 = vector.load %arg2[%c0_1, %c0_2] : memref<16x128xf32, #tpu.memory_space<vmem>>, vector<16x128xf32>
    %cst = arith.constant dense<0.000000e+00> : vector<128x128xf32>
    %3 = tpu.matmul %1, %2, %cst {dimension_numbers = #tpu.dot_dimension_numbers<[1], [0], [0], [1], [0, 0, 1, 1], [], []>} : vector<128x16xf32>, vector<16x128xf32>, vector<128x128xf32> -> vector<128x128xf32>
    %c0_3 = arith.constant 0 : index
    %c0_4 = arith.constant 0 : index
    %4 = vector.load %arg3[%c0_3, %c0_4] : memref<1x128xf32, #tpu.memory_space<vmem>>, vector<1x128xf32>
    %5 = vector.broadcast %4 : vector<1x128xf32> to vector<128x128xf32>
    %6 = arith.addf %3, %5 : vector<128x128xf32>
    %cst_5 = arith.constant 0.000000e+00 : f32
    %7 = vector.broadcast %cst_5 : f32 to vector<128x128xf32>
    %8 = arith.maximumf %6, %7 : vector<128x128xf32>
    %c0_6 = arith.constant 0 : index
    %c0_7 = arith.constant 0 : index
    %9 = vector.load %arg4[%c0_6, %c0_7] : memref<128x128xf32, #tpu.memory_space<vmem>>, vector<128x128xf32>
    %cst_8 = arith.constant dense<0.000000e+00> : vector<128x128xf32>
    %10 = tpu.matmul %8, %9, %cst_8 {dimension_numbers = #tpu.dot_dimension_numbers<[1], [0], [0], [1], [0, 0, 1, 1], [], []>} : vector<128x128xf32>, vector<128x128xf32>, vector<128x128xf32> -> vector<128x128xf32>
    %c0_9 = arith.constant 0 : index
    %c0_10 = arith.constant 0 : index
    %11 = vector.load %arg5[%c0_9, %c0_10] : memref<1x128xf32, #tpu.memory_space<vmem>>, vector<1x128xf32>
    %12 = vector.broadcast %11 : vector<1x128xf32> to vector<128x128xf32>
    %13 = arith.addf %10, %12 : vector<128x128xf32>
    %cst_11 = arith.constant 0.000000e+00 : f32
    %14 = vector.broadcast %cst_11 : f32 to vector<128x128xf32>
    %15 = arith.maximumf %13, %14 : vector<128x128xf32>
    %c0_12 = arith.constant 0 : index
    %c0_13 = arith.constant 0 : index
    %16 = vector.load %arg6[%c0_12, %c0_13] : memref<128x128xf32, #tpu.memory_space<vmem>>, vector<128x128xf32>
    %cst_14 = arith.constant dense<0.000000e+00> : vector<128x128xf32>
    %17 = tpu.matmul %15, %16, %cst_14 {dimension_numbers = #tpu.dot_dimension_numbers<[1], [0], [0], [1], [0, 0, 1, 1], [], []>} : vector<128x128xf32>, vector<128x128xf32>, vector<128x128xf32> -> vector<128x128xf32>
    %c0_15 = arith.constant 0 : index
    %c0_16 = arith.constant 0 : index
    %18 = vector.load %arg7[%c0_15, %c0_16] : memref<1x128xf32, #tpu.memory_space<vmem>>, vector<1x128xf32>
    %19 = vector.broadcast %18 : vector<1x128xf32> to vector<128x128xf32>
    %20 = arith.addf %17, %19 : vector<128x128xf32>
    %cst_17 = arith.constant 0.000000e+00 : f32
    %21 = vector.broadcast %cst_17 : f32 to vector<128x128xf32>
    %22 = arith.maximumf %20, %21 : vector<128x128xf32>
    %c0_18 = arith.constant 0 : index
    %c0_19 = arith.constant 0 : index
    %23 = vector.load %arg8[%c0_18, %c0_19] : memref<128x128xf32, #tpu.memory_space<vmem>>, vector<128x128xf32>
    %cst_20 = arith.constant dense<0.000000e+00> : vector<128x128xf32>
    %24 = tpu.matmul %22, %23, %cst_20 {dimension_numbers = #tpu.dot_dimension_numbers<[1], [0], [0], [1], [0, 0, 1, 1], [], []>} : vector<128x128xf32>, vector<128x128xf32>, vector<128x128xf32> -> vector<128x128xf32>
    %c0_21 = arith.constant 0 : index
    %c0_22 = arith.constant 0 : index
    %25 = vector.load %arg9[%c0_21, %c0_22] : memref<1x128xf32, #tpu.memory_space<vmem>>, vector<1x128xf32>
    %26 = vector.broadcast %25 : vector<1x128xf32> to vector<128x128xf32>
    %27 = arith.addf %24, %26 : vector<128x128xf32>
    %c0_23 = arith.constant 0 : index
    %c0_24 = arith.constant 0 : index
    %28 = vector.load %arg10[%c0_23, %c0_24] : memref<128x128xf32, #tpu.memory_space<vmem>>, vector<128x128xf32>
    %cst_25 = arith.constant dense<0.000000e+00> : vector<128x128xf32>
    %29 = tpu.matmul %27, %28, %cst_25 {dimension_numbers = #tpu.dot_dimension_numbers<[1], [0], [0], [1], [0, 0, 1, 1], [], []>} : vector<128x128xf32>, vector<128x128xf32>, vector<128x128xf32> -> vector<128x128xf32>
    %c0_26 = arith.constant 0 : index
    %c0_27 = arith.constant 0 : index
    %30 = vector.load %arg11[%c0_26, %c0_27] : memref<1x128xf32, #tpu.memory_space<vmem>>, vector<1x128xf32>
    %31 = vector.broadcast %30 : vector<1x128xf32> to vector<128x128xf32>
    %32 = arith.addf %29, %31 : vector<128x128xf32>
    %cst_28 = arith.constant 0.000000e+00 : f32
    %33 = vector.broadcast %cst_28 : f32 to vector<128x128xf32>
    %34 = arith.maximumf %32, %33 : vector<128x128xf32>
    %c0_29 = arith.constant 0 : index
    %c0_30 = arith.constant 0 : index
    %35 = vector.load %arg12[%c0_29, %c0_30] : memref<128x128xf32, #tpu.memory_space<vmem>>, vector<128x128xf32>
    %cst_31 = arith.constant dense<0.000000e+00> : vector<128x128xf32>
    %36 = tpu.matmul %34, %35, %cst_31 {dimension_numbers = #tpu.dot_dimension_numbers<[1], [0], [0], [1], [0, 0, 1, 1], [], []>} : vector<128x128xf32>, vector<128x128xf32>, vector<128x128xf32> -> vector<128x128xf32>
    %c0_32 = arith.constant 0 : index
    %c0_33 = arith.constant 0 : index
    %37 = vector.load %arg13[%c0_32, %c0_33] : memref<1x128xf32, #tpu.memory_space<vmem>>, vector<1x128xf32>
    %38 = vector.broadcast %37 : vector<1x128xf32> to vector<128x128xf32>
    %39 = arith.addf %36, %38 : vector<128x128xf32>
    %cst_34 = arith.constant 0.000000e+00 : f32
    %40 = vector.broadcast %cst_34 : f32 to vector<128x128xf32>
    %41 = arith.maximumf %39, %40 : vector<128x128xf32>
    %c0_35 = arith.constant 0 : index
    %c0_36 = arith.constant 0 : index
    %42 = vector.load %arg14[%c0_35, %c0_36] : memref<128x128xf32, #tpu.memory_space<vmem>>, vector<128x128xf32>
    %cst_37 = arith.constant dense<0.000000e+00> : vector<128x128xf32>
    %43 = tpu.matmul %41, %42, %cst_37 {dimension_numbers = #tpu.dot_dimension_numbers<[1], [0], [0], [1], [0, 0, 1, 1], [], []>} : vector<128x128xf32>, vector<128x128xf32>, vector<128x128xf32> -> vector<128x128xf32>
    %c0_38 = arith.constant 0 : index
    %c0_39 = arith.constant 0 : index
    %44 = vector.load %arg15[%c0_38, %c0_39] : memref<1x128xf32, #tpu.memory_space<vmem>>, vector<1x128xf32>
    %45 = vector.broadcast %44 : vector<1x128xf32> to vector<128x128xf32>
    %46 = arith.addf %43, %45 : vector<128x128xf32>
    %cst_40 = arith.constant 0.000000e+00 : f32
    %47 = vector.broadcast %cst_40 : f32 to vector<128x128xf32>
    %48 = arith.maximumf %46, %47 : vector<128x128xf32>
    %c0_41 = arith.constant 0 : index
    %c0_42 = arith.constant 0 : index
    %49 = vector.load %arg16[%c0_41, %c0_42] : memref<128x16xf32, #tpu.memory_space<vmem>>, vector<128x16xf32>
    %cst_43 = arith.constant dense<0.000000e+00> : vector<128x16xf32>
    %50 = tpu.matmul %48, %49, %cst_43 {dimension_numbers = #tpu.dot_dimension_numbers<[1], [0], [0], [1], [0, 0, 1, 1], [], []>} : vector<128x128xf32>, vector<128x16xf32>, vector<128x16xf32> -> vector<128x16xf32>
    %c0_44 = arith.constant 0 : index
    %c0_45 = arith.constant 0 : index
    %51 = vector.load %arg17[%c0_44, %c0_45] : memref<1x16xf32, #tpu.memory_space<vmem>>, vector<1x16xf32>
    %52 = vector.broadcast %51 : vector<1x16xf32> to vector<128x16xf32>
    %53 = arith.addf %50, %52 : vector<128x16xf32>
    %54 = math.tanh %53 : vector<128x16xf32>
    %c0_46 = arith.constant 0 : index
    %c0_47 = arith.constant 0 : index
    %55 = vector.load %arg18[%c0_46, %c0_47] : memref<128x16xf32, #tpu.memory_space<vmem>>, vector<128x16xf32>
    tpu.vector_store %arg18[%c0_46, %c0_47], %54 {strides = array<i32>} : memref<128x16xf32, #tpu.memory_space<vmem>>, vector<128x16xf32>,
    return
  }
  func.func @transform_0(%arg0: i32) -> (i32, i32) {
    %c0_i32 = arith.constant 0 : i32
    %c0_i32_0 = arith.constant 0 : i32
    return %arg0, %c0_i32 : i32, i32
  }
  func.func @transform_1(%arg0: i32) -> (i32, i32) {
    %c0_i32 = arith.constant 0 : i32
    %c0_i32_0 = arith.constant 0 : i32
    %c0_i32_1 = arith.constant 0 : i32
    return %c0_i32, %c0_i32_0 : i32, i32
  }
  func.func @transform_2(%arg0: i32) -> (i32, i32) {
    %c0_i32 = arith.constant 0 : i32
    %c0_i32_0 = arith.constant 0 : i32
    %c0_i32_1 = arith.constant 0 : i32
    return %c0_i32, %c0_i32_0 : i32, i32
  }
  func.func @transform_3(%arg0: i32) -> (i32, i32) {
    %c0_i32 = arith.constant 0 : i32
    %c0_i32_0 = arith.constant 0 : i32
    %c0_i32_1 = arith.constant 0 : i32
    return %c0_i32, %c0_i32_0 : i32, i32
  }
  func.func @transform_4(%arg0: i32) -> (i32, i32) {
    %c0_i32 = arith.constant 0 : i32
    %c0_i32_0 = arith.constant 0 : i32
    %c0_i32_1 = arith.constant 0 : i32
    return %c0_i32, %c0_i32_0 : i32, i32
  }
  func.func @transform_5(%arg0: i32) -> (i32, i32) {
    %c0_i32 = arith.constant 0 : i32
    %c0_i32_0 = arith.constant 0 : i32
    %c0_i32_1 = arith.constant 0 : i32
    return %c0_i32, %c0_i32_0 : i32, i32
  }
  func.func @transform_6(%arg0: i32) -> (i32, i32) {
    %c0_i32 = arith.constant 0 : i32
    %c0_i32_0 = arith.constant 0 : i32
    %c0_i32_1 = arith.constant 0 : i32
    return %c0_i32, %c0_i32_0 : i32, i32
  }
  func.func @transform_7(%arg0: i32) -> (i32, i32) {
    %c0_i32 = arith.constant 0 : i32
    %c0_i32_0 = arith.constant 0 : i32
    %c0_i32_1 = arith.constant 0 : i32
    return %c0_i32, %c0_i32_0 : i32, i32
  }
  func.func @transform_8(%arg0: i32) -> (i32, i32) {
    %c0_i32 = arith.constant 0 : i32
    %c0_i32_0 = arith.constant 0 : i32
    %c0_i32_1 = arith.constant 0 : i32
    return %c0_i32, %c0_i32_0 : i32, i32
  }
  func.func @transform_9(%arg0: i32) -> (i32, i32) {
    %c0_i32 = arith.constant 0 : i32
    %c0_i32_0 = arith.constant 0 : i32
    %c0_i32_1 = arith.constant 0 : i32
    return %c0_i32, %c0_i32_0 : i32, i32
  }
  func.func @transform_10(%arg0: i32) -> (i32, i32) {
    %c0_i32 = arith.constant 0 : i32
    %c0_i32_0 = arith.constant 0 : i32
    %c0_i32_1 = arith.constant 0 : i32
    return %c0_i32, %c0_i32_0 : i32, i32
  }
  func.func @transform_11(%arg0: i32) -> (i32, i32) {
    %c0_i32 = arith.constant 0 : i32
    %c0_i32_0 = arith.constant 0 : i32
    %c0_i32_1 = arith.constant 0 : i32
    return %c0_i32, %c0_i32_0 : i32, i32
  }
  func.func @transform_12(%arg0: i32) -> (i32, i32) {
    %c0_i32 = arith.constant 0 : i32
    %c0_i32_0 = arith.constant 0 : i32
    %c0_i32_1 = arith.constant 0 : i32
    return %c0_i32, %c0_i32_0 : i32, i32
  }
  func.func @transform_13(%arg0: i32) -> (i32, i32) {
    %c0_i32 = arith.constant 0 : i32
    %c0_i32_0 = arith.constant 0 : i32
    %c0_i32_1 = arith.constant 0 : i32
    return %c0_i32, %c0_i32_0 : i32, i32
  }
  func.func @transform_14(%arg0: i32) -> (i32, i32) {
    %c0_i32 = arith.constant 0 : i32
    %c0_i32_0 = arith.constant 0 : i32
    %c0_i32_1 = arith.constant 0 : i32
    return %c0_i32, %c0_i32_0 : i32, i32
  }
  func.func @transform_15(%arg0: i32) -> (i32, i32) {
    %c0_i32 = arith.constant 0 : i32
    %c0_i32_0 = arith.constant 0 : i32
    %c0_i32_1 = arith.constant 0 : i32
    return %c0_i32, %c0_i32_0 : i32, i32
  }
  func.func @transform_16(%arg0: i32) -> (i32, i32) {
    %c0_i32 = arith.constant 0 : i32
    %c0_i32_0 = arith.constant 0 : i32
    %c0_i32_1 = arith.constant 0 : i32
    return %c0_i32, %c0_i32_0 : i32, i32
  }
  func.func @transform_17(%arg0: i32) -> (i32, i32) {
    %c0_i32 = arith.constant 0 : i32
    %c0_i32_0 = arith.constant 0 : i32
    return %arg0, %c0_i32 : i32, i32
  }
}

</mosaic_0001>

<llo_original>
// kernel: tpu_custom_call.1
$region0: #{tpu_custom_call.1}
  #allocation0 [shape = 'u32[]', space=smem, size = 0x4, offset = 0x4, fixed_abs, tag = 'smem constant byte address 0x4 - core index']
  #allocation1 [shape = 'u32[144,128]{1,0:T(1,128)}', space=vmem, size = 0x12000, scoped, tag = 'internal scratch']
  %s0 = inlined_call_operand.vmem [shape: bf16[256,16], index: 0, kind: input, shape index: {}]
  %s1 = inlined_call_operand.vmem [shape: f32[16,128], index: 1, kind: input, shape index: {}]
  %s2 = inlined_call_operand.vmem [shape: f32[1,128], index: 2, kind: input, shape index: {}]
  %s3 = inlined_call_operand.vmem [shape: f32[128,128], index: 3, kind: input, shape index: {}]
  %s4 = inlined_call_operand.vmem [shape: f32[1,128], index: 4, kind: input, shape index: {}]
  %s5 = inlined_call_operand.vmem [shape: f32[128,128], index: 5, kind: input, shape index: {}]
  %s6 = inlined_call_operand.vmem [shape: f32[1,128], index: 6, kind: input, shape index: {}]
  %s7 = inlined_call_operand.hbm [shape: f32[128,128], index: 7, kind: input, shape index: {}]
  %s8 = inlined_call_operand.vmem [shape: f32[1,128], index: 8, kind: input, shape index: {}]
  %s9 = inlined_call_operand.hbm [shape: f32[128,128], index: 9, kind: input, shape index: {}]
  %s10 = inlined_call_operand.vmem [shape: f32[1,128], index: 10, kind: input, shape index: {}]
  %s11 = inlined_call_operand.hbm [shape: f32[128,128], index: 11, kind: input, shape index: {}]
  %s12 = inlined_call_operand.vmem [shape: f32[1,128], index: 12, kind: input, shape index: {}]
  %s13 = inlined_call_operand.hbm [shape: f32[128,128], index: 13, kind: input, shape index: {}]
  %s14 = inlined_call_operand.vmem [shape: f32[1,128], index: 14, kind: input, shape index: {}]
  %s15 = inlined_call_operand.vmem [shape: f32[128,16], index: 15, kind: input, shape index: {}]
  %s16 = inlined_call_operand.vmem [shape: f32[1,16], index: 16, kind: input, shape index: {}]
  %s17 = inlined_call_operand.vmem [shape: f32[256,16], index: 17, kind: output, shape index: {}]
  %s18 = sld [smem:[#allocation0]]
  $region117: #{tpu_custom_call.1} parent=0
    _
  %s20 = ssub.s32 1, %s18
  %s21 = scalar_select 0, %s20, %s18
  $region1: #{tpu_custom_call.1} parent=0
    #allocation2 [shape = 'u8[65536]{0}', space=vmem, size = 0x10000, scoped, tag = 'input window, operand 7, single buffered']
    #allocation3 [shape = 's32[2]{0}', space=sflag, size = 0x8, scoped, tag = 'scoped memory for tpu_custom_call.1']
    #allocation4 [shape = 'u8[65536]{0}', space=vmem, size = 0x10000, scoped, tag = 'input window, operand 9, single buffered']
    #allocation5 [shape = 's32[1]{0}', space=sflag, size = 0x4, scoped, tag = 'scoped memory for tpu_custom_call.1']
    #allocation6 [shape = 'u8[65536]{0}', space=vmem, size = 0x10000, scoped, tag = 'input window, operand 11, single buffered']
    #allocation7 [shape = 'u8[65536]{0}', space=vmem, size = 0x10000, scoped, tag = 'input window, operand 13, single buffered']
    #allocation8 [shape = 's32[1]{0}', space=sflag, size = 0x4, scoped, tag = 'scoped memory for tpu_custom_call.1']
    %22 = vsyncpa [#allocation3], 0
    %23 = vsyncpa [#allocation5], 0
    %24 = vsyncpa [#allocation8], 0
    loop: start=0, step=1, limit=4
    $region2: #{tpu_custom_call.1} parent=1 // loop_pre_header
      _
    $region3: #{tpu_custom_call.1} parent=1 // loop_header
      %s26 = sphi 0, %s30
      %p27 = scmp.ge.s32.totalorder %s26, 4
      %s36 = sphi 0, %s38
      %s39 = sphi 0, %s36
      %s40 = sphi 0, %s39
      %s56 = sphi 0, %s40
      %s60 = sphi 0, %s60
      %s62 = sphi 0, %s60
      %s63 = sphi 0, %s62
      %s77 = sphi 0, %s63
      %s81 = sphi 0, %s81
      %s83 = sphi 0, %s81
      %s84 = sphi 0, %s83
      %s98 = sphi 0, %s84
      %s102 = sphi 0, %s102
      %s104 = sphi 0, %s102
      %s105 = sphi 0, %s104
      %s119 = sphi 0, %s105
      %s123 = sphi 0, %s123
      %s125 = sphi 0, %s123
      %s126 = sphi 0, %s125
      %s140 = sphi 0, %s126
      %s144 = sphi 0, %s144
      %s146 = sphi 0, %s144
      %s147 = sphi 0, %s146
      %s161 = sphi 0, %s147
      %s165 = sphi 0, %s165
      %s167 = sphi 0, %s165
      %s168 = sphi 0, %s167
      %s182 = sphi 0, %s168
      %s186 = sphi 0, %s186
      %s188 = sphi 0, %s186
      %s189 = sphi 0, %s188
      %s203 = sphi 0, %s189
      %s207 = sphi 0, %s207
      %s209 = sphi 0, %s207
      %s210 = sphi 0, %s209
      %s224 = sphi 0, %s210
      %s228 = sphi 0, %s228
      %s230 = sphi 0, %s228
      %s231 = sphi 0, %s230
      %s245 = sphi 0, %s231
      %s249 = sphi 0, %s249
      %s251 = sphi 0, %s249
      %s252 = sphi 0, %s251
      %s266 = sphi 0, %s252
      %s270 = sphi 0, %s270
      %s272 = sphi 0, %s270
      %s273 = sphi 0, %s272
      %s287 = sphi 0, %s273
      %s291 = sphi 0, %s291
      %s293 = sphi 0, %s291
      %s294 = sphi 0, %s293
      %s308 = sphi 0, %s294
      %s312 = sphi 0, %s312
      %s314 = sphi 0, %s312
      %s315 = sphi 0, %s314
      %s329 = sphi 0, %s315
      %s333 = sphi 0, %s333
      %s335 = sphi 0, %s333
      %s336 = sphi 0, %s335
      %s350 = sphi 0, %s336
      %s354 = sphi 0, %s354
      %s356 = sphi 0, %s354
      %s357 = sphi 0, %s356
      %s371 = sphi 0, %s357
      %s375 = sphi 0, %s375
      %s377 = sphi 0, %s375
      %s378 = sphi 0, %s377
      %s392 = sphi 0, %s378
      %s398 = sphi 0, %s400
      %s401 = sphi 0, %s398
      %s402 = sphi 0, %s401
      %s418 = sphi 0, %s402
    $region4: #{tpu_custom_call.1} parent=1 // loop_header_branch
      %29 = sbr.rel (%p27) target = $region8
    $region5: #{tpu_custom_call.1} parent=1 // loop_body
      %s31 = ssub.s32 %s26, 1
      %s32 = ssub.s32 %s26, 2
      %s33 = sadd.s32 %s26, 1
      %s34 = ssub.s32 %s26, %s33
      %p35 = scmp.eq.s32.totalorder %s34, 0
      %s37 = sadd.s32 %s36, 1
      %s38 = scalar_select %p35, %s36, %s37
      %p41 = pneg %p35
      %p42 = scmp.eq.s32.totalorder %s26, 1
      %p43 = por %p41, %p42
      %p44 = scmp.ne.s32.totalorder %s36, %s39
      %p45 = scmp.eq.s32.totalorder %s26, 0
      %p46 = por %p44, %p45
      %p47 = scmp.ne.s32.totalorder %s36, %s39
      %p48 = scmp.eq.s32.totalorder %s31, 1
      %p49 = por %p47, %p48
      %p50 = scmp.ne.s32.totalorder %s39, %s40
      %p51 = scmp.eq.s32.totalorder %s31, 0
      %p52 = por %p50, %p51
      %p53 = scmp.ne.s32.totalorder %s39, %s40
      %p54 = scmp.eq.s32.totalorder %s32, 1
      %p55 = por %p53, %p54
      %p57 = scmp.ne.s32.totalorder %s40, %s56
      %p58 = scmp.eq.s32.totalorder %s32, 0
      %p59 = por %p57, %p58
      %s61 = sadd.s32 %s60, 1
      %p64 = scmp.eq.s32.totalorder %s26, 1
      %p65 = scmp.ne.s32.totalorder %s60, %s62
      %p66 = scmp.eq.s32.totalorder %s26, 0
      %p67 = por %p65, %p66
      %p68 = scmp.ne.s32.totalorder %s60, %s62
      %p69 = scmp.eq.s32.totalorder %s31, 1
      %p70 = por %p68, %p69
      %p71 = scmp.ne.s32.totalorder %s62, %s63
      %p72 = scmp.eq.s32.totalorder %s31, 0
      %p73 = por %p71, %p72
      %p74 = scmp.ne.s32.totalorder %s62, %s63
      %p75 = scmp.eq.s32.totalorder %s32, 1
      %p76 = por %p74, %p75
      %p78 = scmp.ne.s32.totalorder %s63, %s77
      %p79 = scmp.eq.s32.totalorder %s32, 0
      %p80 = por %p78, %p79
      %s82 = sadd.s32 %s81, 1
      %p85 = scmp.eq.s32.totalorder %s26, 1
      %p86 = scmp.ne.s32.totalorder %s81, %s83
      %p87 = scmp.eq.s32.totalorder %s26, 0
      %p88 = por %p86, %p87
      %p89 = scmp.ne.s32.totalorder %s81, %s83
      %p90 = scmp.eq.s32.totalorder %s31, 1
      %p91 = por %p89, %p90
      %p92 = scmp.ne.s32.totalorder %s83, %s84
      %p93 = scmp.eq.s32.totalorder %s31, 0
      %p94 = por %p92, %p93
      %p95 = scmp.ne.s32.totalorder %s83, %s84
      %p96 = scmp.eq.s32.totalorder %s32, 1
      %p97 = por %p95, %p96
      %p99 = scmp.ne.s32.totalorder %s84, %s98
      %p100 = scmp.eq.s32.totalorder %s32, 0
      %p101 = por %p99, %p100
      %s103 = sadd.s32 %s102, 1
      %p106 = scmp.eq.s32.totalorder %s26, 1
      %p107 = scmp.ne.s32.totalorder %s102, %s104
      %p108 = scmp.eq.s32.totalorder %s26, 0
      %p109 = por %p107, %p108
      %p110 = scmp.ne.s32.totalorder %s102, %s104
      %p111 = scmp.eq.s32.totalorder %s31, 1
      %p112 = por %p110, %p111
      %p113 = scmp.ne.s32.totalorder %s104, %s105
      %p114 = scmp.eq.s32.totalorder %s31, 0
      %p115 = por %p113, %p114
      %p116 = scmp.ne.s32.totalorder %s104, %s105
      %p117 = scmp.eq.s32.totalorder %s32, 1
      %p118 = por %p116, %p117
      %p120 = scmp.ne.s32.totalorder %s105, %s119
      %p121 = scmp.eq.s32.totalorder %s32, 0
      %p122 = por %p120, %p121
      %s124 = sadd.s32 %s123, 1
      %p127 = scmp.eq.s32.totalorder %s26, 1
      %p128 = scmp.ne.s32.totalorder %s123, %s125
      %p129 = scmp.eq.s32.totalorder %s26, 0
      %p130 = por %p128, %p129
      %p131 = scmp.ne.s32.totalorder %s123, %s125
      %p132 = scmp.eq.s32.totalorder %s31, 1
      %p133 = por %p131, %p132
      %p134 = scmp.ne.s32.totalorder %s125, %s126
      %p135 = scmp.eq.s32.totalorder %s31, 0
      %p136 = por %p134, %p135
      %p137 = scmp.ne.s32.totalorder %s125, %s126
      %p138 = scmp.eq.s32.totalorder %s32, 1
      %p139 = por %p137, %p138
      %p141 = scmp.ne.s32.totalorder %s126, %s140
      %p142 = scmp.eq.s32.totalorder %s32, 0
      %p143 = por %p141, %p142
      %s145 = sadd.s32 %s144, 1
      %p148 = scmp.eq.s32.totalorder %s26, 1
      %p149 = scmp.ne.s32.totalorder %s144, %s146
      %p150 = scmp.eq.s32.totalorder %s26, 0
      %p151 = por %p149, %p150
      %p152 = scmp.ne.s32.totalorder %s144, %s146
      %p153 = scmp.eq.s32.totalorder %s31, 1
      %p154 = por %p152, %p153
      %p155 = scmp.ne.s32.totalorder %s146, %s147
      %p156 = scmp.eq.s32.totalorder %s31, 0
      %p157 = por %p155, %p156
      %p158 = scmp.ne.s32.totalorder %s146, %s147
      %p159 = scmp.eq.s32.totalorder %s32, 1
      %p160 = por %p158, %p159
      %p162 = scmp.ne.s32.totalorder %s147, %s161
      %p163 = scmp.eq.s32.totalorder %s32, 0
      %p164 = por %p162, %p163
      %s166 = sadd.s32 %s165, 1
      %p169 = scmp.eq.s32.totalorder %s26, 1
      %p170 = scmp.ne.s32.totalorder %s165, %s167
      %p171 = scmp.eq.s32.totalorder %s26, 0
      %p172 = por %p170, %p171
      %p173 = scmp.ne.s32.totalorder %s165, %s167
      %p174 = scmp.eq.s32.totalorder %s31, 1
      %p175 = por %p173, %p174
      %p176 = scmp.ne.s32.totalorder %s167, %s168
      %p177 = scmp.eq.s32.totalorder %s31, 0
      %p178 = por %p176, %p177
      %p179 = scmp.ne.s32.totalorder %s167, %s168
      %p180 = scmp.eq.s32.totalorder %s32, 1
      %p181 = por %p179, %p180
      %p183 = scmp.ne.s32.totalorder %s168, %s182
      %p184 = scmp.eq.s32.totalorder %s32, 0
      %p185 = por %p183, %p184
      %s187 = sadd.s32 %s186, 1
      %p190 = scmp.eq.s32.totalorder %s26, 1
      %p191 = scmp.ne.s32.totalorder %s186, %s188
      %p192 = scmp.eq.s32.totalorder %s26, 0
      %p193 = por %p191, %p192
      %p194 = scmp.ne.s32.totalorder %s186, %s188
      %p195 = scmp.eq.s32.totalorder %s31, 1
      %p196 = por %p194, %p195
      %p197 = scmp.ne.s32.totalorder %s188, %s189
      %p198 = scmp.eq.s32.totalorder %s31, 0
      %p199 = por %p197, %p198
      %p200 = scmp.ne.s32.totalorder %s188, %s189
      %p201 = scmp.eq.s32.totalorder %s32, 1
      %p202 = por %p200, %p201
      %p204 = scmp.ne.s32.totalorder %s189, %s203
      %p205 = scmp.eq.s32.totalorder %s32, 0
      %p206 = por %p204, %p205
      %s208 = sadd.s32 %s207, 1
      %p211 = scmp.eq.s32.totalorder %s26, 1
      %p212 = scmp.ne.s32.totalorder %s207, %s209
      %p213 = scmp.eq.s32.totalorder %s26, 0
      %p214 = por %p212, %p213
      %p215 = scmp.ne.s32.totalorder %s207, %s209
      %p216 = scmp.eq.s32.totalorder %s31, 1
      %p217 = por %p215, %p216
      %p218 = scmp.ne.s32.totalorder %s209, %s210
      %p219 = scmp.eq.s32.totalorder %s31, 0
      %p220 = por %p218, %p219
      %p221 = scmp.ne.s32.totalorder %s209, %s210
      %p222 = scmp.eq.s32.totalorder %s32, 1
      %p223 = por %p221, %p222
      %p225 = scmp.ne.s32.totalorder %s210, %s224
      %p226 = scmp.eq.s32.totalorder %s32, 0
      %p227 = por %p225, %p226
      %s229 = sadd.s32 %s228, 1
      %p232 = scmp.eq.s32.totalorder %s26, 1
      %p233 = scmp.ne.s32.totalorder %s228, %s230
      %p234 = scmp.eq.s32.totalorder %s26, 0
      %p235 = por %p233, %p234
      %p236 = scmp.ne.s32.totalorder %s228, %s230
      %p237 = scmp.eq.s32.totalorder %s31, 1
      %p238 = por %p236, %p237
      %p239 = scmp.ne.s32.totalorder %s230, %s231
      %p240 = scmp.eq.s32.totalorder %s31, 0
      %p241 = por %p239, %p240
      %p242 = scmp.ne.s32.totalorder %s230, %s231
      %p243 = scmp.eq.s32.totalorder %s32, 1
      %p244 = por %p242, %p243
      %p246 = scmp.ne.s32.totalorder %s231, %s245
      %p247 = scmp.eq.s32.totalorder %s32, 0
      %p248 = por %p246, %p247
      %s250 = sadd.s32 %s249, 1
      %p253 = scmp.eq.s32.totalorder %s26, 1
      %p254 = scmp.ne.s32.totalorder %s249, %s251
      %p255 = scmp.eq.s32.totalorder %s26, 0
      %p256 = por %p254, %p255
      %p257 = scmp.ne.s32.totalorder %s249, %s251
      %p258 = scmp.eq.s32.totalorder %s31, 1
      %p259 = por %p257, %p258
      %p260 = scmp.ne.s32.totalorder %s251, %s252
      %p261 = scmp.eq.s32.totalorder %s31, 0
      %p262 = por %p260, %p261
      %p263 = scmp.ne.s32.totalorder %s251, %s252
      %p264 = scmp.eq.s32.totalorder %s32, 1
      %p265 = por %p263, %p264
      %p267 = scmp.ne.s32.totalorder %s252, %s266
      %p268 = scmp.eq.s32.totalorder %s32, 0
      %p269 = por %p267, %p268
      %s271 = sadd.s32 %s270, 1
      %p274 = scmp.eq.s32.totalorder %s26, 1
      %p275 = scmp.ne.s32.totalorder %s270, %s272
      %p276 = scmp.eq.s32.totalorder %s26, 0
      %p277 = por %p275, %p276
      %p278 = scmp.ne.s32.totalorder %s270, %s272
      %p279 = scmp.eq.s32.totalorder %s31, 1
      %p280 = por %p278, %p279
      %p281 = scmp.ne.s32.totalorder %s272, %s273
      %p282 = scmp.eq.s32.totalorder %s31, 0
      %p283 = por %p281, %p282
      %p284 = scmp.ne.s32.totalorder %s272, %s273
      %p285 = scmp.eq.s32.totalorder %s32, 1
      %p286 = por %p284, %p285
      %p288 = scmp.ne.s32.totalorder %s273, %s287
      %p289 = scmp.eq.s32.totalorder %s32, 0
      %p290 = por %p288, %p289
      %s292 = sadd.s32 %s291, 1
      %p295 = scmp.eq.s32.totalorder %s26, 1
      %p296 = scmp.ne.s32.totalorder %s291, %s293
      %p297 = scmp.eq.s32.totalorder %s26, 0
      %p298 = por %p296, %p297
      %p299 = scmp.ne.s32.totalorder %s291, %s293
      %p300 = scmp.eq.s32.totalorder %s31, 1
      %p301 = por %p299, %p300
      %p302 = scmp.ne.s32.totalorder %s293, %s294
      %p303 = scmp.eq.s32.totalorder %s31, 0
      %p304 = por %p302, %p303
      %p305 = scmp.ne.s32.totalorder %s293, %s294
      %p306 = scmp.eq.s32.totalorder %s32, 1
      %p307 = por %p305, %p306
      %p309 = scmp.ne.s32.totalorder %s294, %s308
      %p310 = scmp.eq.s32.totalorder %s32, 0
      %p311 = por %p309, %p310
      %s313 = sadd.s32 %s312, 1
      %p316 = scmp.eq.s32.totalorder %s26, 1
      %p317 = scmp.ne.s32.totalorder %s312, %s314
      %p318 = scmp.eq.s32.totalorder %s26, 0
      %p319 = por %p317, %p318
      %p320 = scmp.ne.s32.totalorder %s312, %s314
      %p321 = scmp.eq.s32.totalorder %s31, 1
      %p322 = por %p320, %p321
      %p323 = scmp.ne.s32.totalorder %s314, %s315
      %p324 = scmp.eq.s32.totalorder %s31, 0
      %p325 = por %p323, %p324
      %p326 = scmp.ne.s32.totalorder %s314, %s315
      %p327 = scmp.eq.s32.totalorder %s32, 1
      %p328 = por %p326, %p327
      %p330 = scmp.ne.s32.totalorder %s315, %s329
      %p331 = scmp.eq.s32.totalorder %s32, 0
      %p332 = por %p330, %p331
      %s334 = sadd.s32 %s333, 1
      %p337 = scmp.eq.s32.totalorder %s26, 1
      %p338 = scmp.ne.s32.totalorder %s333, %s335
      %p339 = scmp.eq.s32.totalorder %s26, 0
      %p340 = por %p338, %p339
      %p341 = scmp.ne.s32.totalorder %s333, %s335
      %p342 = scmp.eq.s32.totalorder %s31, 1
      %p343 = por %p341, %p342
      %p344 = scmp.ne.s32.totalorder %s335, %s336
      %p345 = scmp.eq.s32.totalorder %s31, 0
      %p346 = por %p344, %p345
      %p347 = scmp.ne.s32.totalorder %s335, %s336
      %p348 = scmp.eq.s32.totalorder %s32, 1
      %p349 = por %p347, %p348
      %p351 = scmp.ne.s32.totalorder %s336, %s350
      %p352 = scmp.eq.s32.totalorder %s32, 0
      %p353 = por %p351, %p352
      %s355 = sadd.s32 %s354, 1
      %p358 = scmp.eq.s32.totalorder %s26, 1
      %p359 = scmp.ne.s32.totalorder %s354, %s356
      %p360 = scmp.eq.s32.totalorder %s26, 0
      %p361 = por %p359, %p360
      %p362 = scmp.ne.s32.totalorder %s354, %s356
      %p363 = scmp.eq.s32.totalorder %s31, 1
      %p364 = por %p362, %p363
      %p365 = scmp.ne.s32.totalorder %s356, %s357
      %p366 = scmp.eq.s32.totalorder %s31, 0
      %p367 = por %p365, %p366
      %p368 = scmp.ne.s32.totalorder %s356, %s357
      %p369 = scmp.eq.s32.totalorder %s32, 1
      %p370 = por %p368, %p369
      %p372 = scmp.ne.s32.totalorder %s357, %s371
      %p373 = scmp.eq.s32.totalorder %s32, 0
      %p374 = por %p372, %p373
      %s376 = sadd.s32 %s375, 1
      %p379 = scmp.eq.s32.totalorder %s26, 1
      %p380 = scmp.ne.s32.totalorder %s375, %s377
      %p381 = scmp.eq.s32.totalorder %s26, 0
      %p382 = por %p380, %p381
      %p383 = scmp.ne.s32.totalorder %s375, %s377
      %p384 = scmp.eq.s32.totalorder %s31, 1
      %p385 = por %p383, %p384
      %p386 = scmp.ne.s32.totalorder %s377, %s378
      %p387 = scmp.eq.s32.totalorder %s31, 0
      %p388 = por %p386, %p387
      %p389 = scmp.ne.s32.totalorder %s377, %s378
      %p390 = scmp.eq.s32.totalorder %s32, 1
      %p391 = por %p389, %p390
      %p393 = scmp.ne.s32.totalorder %s378, %s392
      %p394 = scmp.eq.s32.totalorder %s32, 0
      %p395 = por %p393, %p394
      %s396 = ssub.s32 %s26, %s33
      %p397 = scmp.eq.s32.totalorder %s396, 0
      %s399 = sadd.s32 %s398, 1
      %s400 = scalar_select %p397, %s398, %s399
      %p403 = pneg %p397
      %p404 = scmp.eq.s32.totalorder %s26, 1
      %p405 = por %p403, %p404
      %p406 = scmp.ne.s32.totalorder %s398, %s401
      %p407 = scmp.eq.s32.totalorder %s26, 0
      %p408 = por %p406, %p407
      %p409 = scmp.ne.s32.totalorder %s398, %s401
      %p410 = scmp.eq.s32.totalorder %s31, 1
      %p411 = por %p409, %p410
      %p412 = scmp.ne.s32.totalorder %s401, %s402
      %p413 = scmp.eq.s32.totalorder %s31, 0
      %p414 = por %p412, %p413
      %p415 = scmp.ne.s32.totalorder %s401, %s402
      %p416 = scmp.eq.s32.totalorder %s32, 1
      %p417 = por %p415, %p416
      %p419 = scmp.ne.s32.totalorder %s402, %s418
      %p420 = scmp.eq.s32.totalorder %s32, 0
      %p421 = por %p419, %p420
      %p422 = scmp.le.s32.totalorder 1, %s26
      %p423 = scmp.lt.s32.totalorder %s26, 3
      %p424 = pnand %p422, %p423
      %p425 = pneg %p424
      // Predicated region
      $region9: #{tpu_custom_call.1} parent=5 // pred_check
        _
      $region10: #{tpu_custom_call.1} parent=5 // pred_check_branch
        %427 = sbr.rel (%p424) target = $region12
      $region11: #{tpu_custom_call.1} parent=5 // pred_region
        %s428 = ssub.s32 %s26, 1
        // Predicated region
        $region13: #{tpu_custom_call.1} parent=11 // pred_check
          %p429 = pneg %p73
        $region14: #{tpu_custom_call.1} parent=11 // pred_check_branch
          %431 = sbr.rel (%p429) target = $region16
        $region15: #{tpu_custom_call.1} parent=11 // pred_region
          _
        $region16: #{tpu_custom_call.1} parent=11 // pred_fallthru
          _
        // Predicated region
        $region17: #{tpu_custom_call.1} parent=11 // pred_check
          %p432 = pneg %p94
        $region18: #{tpu_custom_call.1} parent=11 // pred_check_branch
          %434 = sbr.rel (%p432) target = $region20
        $region19: #{tpu_custom_call.1} parent=11 // pred_region
          _
        $region20: #{tpu_custom_call.1} parent=11 // pred_fallthru
          _
        // Predicated region
        $region21: #{tpu_custom_call.1} parent=11 // pred_check
          %p435 = pneg %p115
        $region22: #{tpu_custom_call.1} parent=11 // pred_check_branch
          %437 = sbr.rel (%p435) target = $region24
        $region23: #{tpu_custom_call.1} parent=11 // pred_region
          _
        $region24: #{tpu_custom_call.1} parent=11 // pred_fallthru
          _
        // Predicated region
        $region25: #{tpu_custom_call.1} parent=11 // pred_check
          %p438 = pneg %p136
        $region26: #{tpu_custom_call.1} parent=11 // pred_check_branch
          %440 = sbr.rel (%p438) target = $region28
        $region27: #{tpu_custom_call.1} parent=11 // pred_region
          _
        $region28: #{tpu_custom_call.1} parent=11 // pred_fallthru
          _
        // Predicated region
        $region29: #{tpu_custom_call.1} parent=11 // pred_check
          %p441 = pneg %p157
        $region30: #{tpu_custom_call.1} parent=11 // pred_check_branch
          %443 = sbr.rel (%p441) target = $region32
        $region31: #{tpu_custom_call.1} parent=11 // pred_region
          _
        $region32: #{tpu_custom_call.1} parent=11 // pred_fallthru
          _
        // Predicated region
        $region33: #{tpu_custom_call.1} parent=11 // pred_check
          %p444 = pneg %p178
        $region34: #{tpu_custom_call.1} parent=11 // pred_check_branch
          %446 = sbr.rel (%p444) target = $region36
        $region35: #{tpu_custom_call.1} parent=11 // pred_region
          _
        $region36: #{tpu_custom_call.1} parent=11 // pred_fallthru
          _
        // Predicated region
        $region37: #{tpu_custom_call.1} parent=11 // pred_check
          %p447 = pneg %p199
        $region38: #{tpu_custom_call.1} parent=11 // pred_check_branch
          %449 = sbr.rel (%p447) target = $region40
        $region39: #{tpu_custom_call.1} parent=11 // pred_region
          %s451 = ssub.s32 2048, 2048
          %452 = vsyncadd [#allocation3], %s451
          %s453 = sshll.u32 [#allocation2], 4
          %s454 = int_to_ptr.vmem [resolvable:$true] %s453
          %459 = dma.hbm_to_vmem [thread:$0]  %s7, 2048, %s454, [#allocation3], 128, 128, 8
        $region40: #{tpu_custom_call.1} parent=11 // pred_fallthru
          _
        // Predicated region
        $region41: #{tpu_custom_call.1} parent=11 // pred_check
          %p460 = pneg %p220
        $region42: #{tpu_custom_call.1} parent=11 // pred_check_branch
          %462 = sbr.rel (%p460) target = $region44
        $region43: #{tpu_custom_call.1} parent=11 // pred_region
          _
        $region44: #{tpu_custom_call.1} parent=11 // pred_fallthru
          _
        // Predicated region
        $region45: #{tpu_custom_call.1} parent=11 // pred_check
          %p463 = pneg %p241
        $region46: #{tpu_custom_call.1} parent=11 // pred_check_branch
          %465 = sbr.rel (%p463) target = $region48
        $region47: #{tpu_custom_call.1} parent=11 // pred_region
          %s467 = ssub.s32 2048, 2048
          %468 = vsyncadd [#allocation5], %s467
          %s469 = sshll.u32 [#allocation4], 4
          %s470 = int_to_ptr.vmem [resolvable:$true] %s469
          %475 = dma.hbm_to_vmem [thread:$0]  %s9, 2048, %s470, [#allocation5], 128, 128, 8
        $region48: #{tpu_custom_call.1} parent=11 // pred_fallthru
          _
        // Predicated region
        $region49: #{tpu_custom_call.1} parent=11 // pred_check
          %p476 = pneg %p262
        $region50: #{tpu_custom_call.1} parent=11 // pred_check_branch
          %478 = sbr.rel (%p476) target = $region52
        $region51: #{tpu_custom_call.1} parent=11 // pred_region
          _
        $region52: #{tpu_custom_call.1} parent=11 // pred_fallthru
          _
        // Predicated region
        $region53: #{tpu_custom_call.1} parent=11 // pred_check
          %p479 = pneg %p283
        $region54: #{tpu_custom_call.1} parent=11 // pred_check_branch
          %481 = sbr.rel (%p479) target = $region56
        $region55: #{tpu_custom_call.1} parent=11 // pred_region
          %s483 = ssub.s32 2048, 2048
          %484 = vsyncadd [#allocation5], %s483
          %s485 = sshll.u32 [#allocation6], 4
          %s486 = int_to_ptr.vmem [resolvable:$true] %s485
          %491 = dma.hbm_to_vmem [thread:$0]  %s11, 2048, %s486, [#allocation5], 128, 128, 8
        $region56: #{tpu_custom_call.1} parent=11 // pred_fallthru
          _
        // Predicated region
        $region57: #{tpu_custom_call.1} parent=11 // pred_check
          %p492 = pneg %p304
        $region58: #{tpu_custom_call.1} parent=11 // pred_check_branch
          %494 = sbr.rel (%p492) target = $region60
        $region59: #{tpu_custom_call.1} parent=11 // pred_region
          _
        $region60: #{tpu_custom_call.1} parent=11 // pred_fallthru
          _
        // Predicated region
        $region61: #{tpu_custom_call.1} parent=11 // pred_check
          %p495 = pneg %p325
        $region62: #{tpu_custom_call.1} parent=11 // pred_check_branch
          %497 = sbr.rel (%p495) target = $region64
        $region63: #{tpu_custom_call.1} parent=11 // pred_region
          %s499 = ssub.s32 2048, 2048
          %500 = vsyncadd [#allocation8], %s499
          %s501 = sshll.u32 [#allocation7], 4
          %s502 = int_to_ptr.vmem [resolvable:$true] %s501
          %507 = dma.hbm_to_vmem [thread:$0]  %s13, 2048, %s502, [#allocation8], 128, 128, 8
        $region64: #{tpu_custom_call.1} parent=11 // pred_fallthru
          _
        // Predicated region
        $region65: #{tpu_custom_call.1} parent=11 // pred_check
          %p508 = pneg %p346
        $region66: #{tpu_custom_call.1} parent=11 // pred_check_branch
          %510 = sbr.rel (%p508) target = $region68
        $region67: #{tpu_custom_call.1} parent=11 // pred_region
          _
        $region68: #{tpu_custom_call.1} parent=11 // pred_fallthru
          _
        // Predicated region
        $region69: #{tpu_custom_call.1} parent=11 // pred_check
          %p511 = pneg %p367
        $region70: #{tpu_custom_call.1} parent=11 // pred_check_branch
          %513 = sbr.rel (%p511) target = $region72
        $region71: #{tpu_custom_call.1} parent=11 // pred_region
          _
        $region72: #{tpu_custom_call.1} parent=11 // pred_fallthru
          _
        // Predicated region
        $region73: #{tpu_custom_call.1} parent=11 // pred_check
          %p514 = pneg %p388
        $region74: #{tpu_custom_call.1} parent=11 // pred_check_branch
          %516 = sbr.rel (%p514) target = $region76
        $region75: #{tpu_custom_call.1} parent=11 // pred_region
          _
        $region76: #{tpu_custom_call.1} parent=11 // pred_fallthru
          _
      $region12: #{tpu_custom_call.1} parent=5 // pred_fallthru
        _
      %p517 = scmp.lt.s32.totalorder %s26, 2
      // Predicated region
      $region77: #{tpu_custom_call.1} parent=5 // pred_check
        %p518 = pneg %p517
      $region78: #{tpu_custom_call.1} parent=5 // pred_check_branch
        %520 = sbr.rel (%p518) target = $region80
      $region79: #{tpu_custom_call.1} parent=5 // pred_region
        // Predicated region
        $region81: #{tpu_custom_call.1} parent=79 // pred_check
          %p521 = pneg %p46
        $region82: #{tpu_custom_call.1} parent=79 // pred_check_branch
          %523 = sbr.rel (%p521) target = $region84
        $region83: #{tpu_custom_call.1} parent=79 // pred_region
          %s524 = smul.u32 16, %s26
          %p525 = scmp.lt.s32.totalorder %s524, 31
          %s526 = scalar_select %p525, %s524, 31
          %s527 = smul.addr %s526, 4
          %s528 = scalar_lea.vmem %s0, %s527
          %s529 = smul.u32 16, %s26
        $region84: #{tpu_custom_call.1} parent=79 // pred_fallthru
          _
      $region80: #{tpu_custom_call.1} parent=5 // pred_fallthru
        _
      %p530 = scmp.le.s32.totalorder 1, %s26
      %p531 = scmp.lt.s32.totalorder %s26, 3
      %p532 = pnand %p530, %p531
      %p533 = pneg %p532
      // Predicated region
      $region85: #{tpu_custom_call.1} parent=5 // pred_check
        _
      $region86: #{tpu_custom_call.1} parent=5 // pred_check_branch
        %535 = sbr.rel (%p532) target = $region88
      $region87: #{tpu_custom_call.1} parent=5 // pred_region
        %s536 = ssub.s32 %s26, 1
        // Predicated region
        $region89: #{tpu_custom_call.1} parent=87 // pred_check
          %p537 = pneg %p199
        $region90: #{tpu_custom_call.1} parent=87 // pred_check_branch
          %539 = sbr.rel (%p537) target = $region92
        $region91: #{tpu_custom_call.1} parent=87 // pred_region
          %540 = dma.done [#allocation3], 2048
        $region92: #{tpu_custom_call.1} parent=87 // pred_fallthru
          _
        // Predicated region
        $region93: #{tpu_custom_call.1} parent=87 // pred_check
          %p541 = pneg %p241
        $region94: #{tpu_custom_call.1} parent=87 // pred_check_branch
          %543 = sbr.rel (%p541) target = $region96
        $region95: #{tpu_custom_call.1} parent=87 // pred_region
          %544 = dma.done [#allocation5], 2048
        $region96: #{tpu_custom_call.1} parent=87 // pred_fallthru
          _
        // Predicated region
        $region97: #{tpu_custom_call.1} parent=87 // pred_check
          %p545 = pneg %p283
        $region98: #{tpu_custom_call.1} parent=87 // pred_check_branch
          %547 = sbr.rel (%p545) target = $region100
        $region99: #{tpu_custom_call.1} parent=87 // pred_region
          %548 = dma.done [#allocation5], 2048
        $region100: #{tpu_custom_call.1} parent=87 // pred_fallthru
          _
        // Predicated region
        $region101: #{tpu_custom_call.1} parent=87 // pred_check
          %p549 = pneg %p325
        $region102: #{tpu_custom_call.1} parent=87 // pred_check_branch
          %551 = sbr.rel (%p549) target = $region104
        $region103: #{tpu_custom_call.1} parent=87 // pred_region
          %552 = dma.done [#allocation8], 2048
        $region104: #{tpu_custom_call.1} parent=87 // pred_fallthru
          _
        %s553 = smul.u32 16, %s31
        %p554 = scmp.lt.s32.totalorder %s553, 31
        %s555 = scalar_select %p554, %s553, 31
        %s556 = smul.addr %s555, 4
        %s557 = scalar_lea.vmem %s0, %s556
        %p558 = pneg %p52
        %p559 = pneg %p49
        %p560 = pneg %p73
        %p561 = pneg %p70
        %p562 = pneg %p94
        %p563 = pneg %p91
        %p564 = pneg %p115
        %p565 = pneg %p112
        %p566 = pneg %p136
        %p567 = pneg %p133
        %p568 = pneg %p157
        %p569 = pneg %p154
        %p570 = pneg %p178
        %p571 = pneg %p175
        %p572 = pneg %p199
        %p573 = pneg %p196
        %p574 = pneg %p220
        %p575 = pneg %p217
        %p576 = pneg %p241
        %p577 = pneg %p238
        %p578 = pneg %p262
        %p579 = pneg %p259
        %p580 = pneg %p283
        %p581 = pneg %p280
        %p582 = pneg %p304
        %p583 = pneg %p301
        %p584 = pneg %p325
        %p585 = pneg %p322
        %p586 = pneg %p346
        %p587 = pneg %p343
        %p588 = pneg %p367
        %p589 = pneg %p364
        %p590 = pneg %p388
        %p591 = pneg %p385
        %p592 = pneg %p414
        %p593 = pneg %p411
        %s594 = smul.u32 16, %s31
        %p595 = scmp.lt.s32.totalorder %s594, 31
        %s596 = scalar_select %p595, %s594, 31
        %s597 = smul.addr %s596, 8
        %s598 = scalar_lea.vmem %s17, %s597
        %s599 = smul.u32 16, %s31
        %p600 = scmp.lt.s32.totalorder %s599, 31
        %s601 = scalar_select %p600, %s599, 31
        %s602 = smul.addr %s601, 4
        %s603 = scalar_lea.vmem %s0, %s602
        %s604 = smul.u32 16, %s31
        %s605 = smul.u32 16, %s31
        %p606 = scmp.lt.s32.totalorder %s605, 31
        %s607 = scalar_select %p606, %s605, 31
        %s608 = smul.addr %s607, 8
        %s609 = scalar_lea.vmem %s17, %s608
        %s610 = smul.u32 16, %s31
        %v611 = vld [vmem:[%s603] sm:$0xf]
        %v612 = vld [vmem:[%s603 + $0x4] sm:$0xf]
        %v613 = vld [vmem:[%s603 + $0x8] sm:$0xf]
        %v614 = vld [vmem:[%s603 + $0xc] sm:$0xf]
        %v615 = vld [vmem:[%s603 + $0x10] sm:$0xf]
        %v616 = vld [vmem:[%s603 + $0x14] sm:$0xf]
        %v617 = vld [vmem:[%s603 + $0x18] sm:$0xf]
        %v618 = vld [vmem:[%s603 + $0x1c] sm:$0xf]
        %v619 = vld [vmem:[%s603 + $0x20] sm:$0xf]
        %v620 = vld [vmem:[%s603 + $0x24] sm:$0xf]
        %v621 = vld [vmem:[%s603 + $0x28] sm:$0xf]
        %v622 = vld [vmem:[%s603 + $0x2c] sm:$0xf]
        %v623 = vld [vmem:[%s603 + $0x30] sm:$0xf]
        %v624 = vld [vmem:[%s603 + $0x34] sm:$0xf]
        %v625 = vld [vmem:[%s603 + $0x38] sm:$0xf]
        %v626 = vld [vmem:[%s603 + $0x3c] sm:$0xf]
        %v627 = vunpack.c.l.bf16 %v611
        %v628 = vunpack.c.l.bf16 %v612
        %v629 = vunpack.c.l.bf16 %v613
        %v630 = vunpack.c.l.bf16 %v614
        %v631 = vunpack.c.l.bf16 %v615
        %v632 = vunpack.c.l.bf16 %v616
        %v633 = vunpack.c.l.bf16 %v617
        %v634 = vunpack.c.l.bf16 %v618
        %v635 = vunpack.c.l.bf16 %v619
        %v636 = vunpack.c.l.bf16 %v620
        %v637 = vunpack.c.l.bf16 %v621
        %v638 = vunpack.c.l.bf16 %v622
        %v639 = vunpack.c.l.bf16 %v623
        %v640 = vunpack.c.l.bf16 %v624
        %v641 = vunpack.c.l.bf16 %v625
        %v642 = vunpack.c.l.bf16 %v626
        %v643 = vld [vmem:[%s1] sm:$0xff]
        %v644 = vld [vmem:[%s1 + $0x8] sm:$0xff]
        %v645 = vld [vmem:[%s2] sm:$0x1]
        %v647 = vlaneseq
        %v648 = vshrl.u32 %v647, 7
        %v649 = vsub.s32 0, %v648
        %v650 = vrot.slane %v645, %v649
        %vm652 = vcmask 130048
        %v654 = vsel %vm652, %v627, 0
        %v657 = vsel %vm652, %v628, 0
        %v660 = vsel %vm652, %v629, 0
        %v663 = vsel %vm652, %v630, 0
        %v666 = vsel %vm652, %v631, 0
        %v669 = vsel %vm652, %v632, 0
        %v672 = vsel %vm652, %v633, 0
        %v675 = vsel %vm652, %v634, 0
        %v678 = vsel %vm652, %v635, 0
        %v681 = vsel %vm652, %v636, 0
        %v684 = vsel %vm652, %v637, 0
        %v687 = vsel %vm652, %v638, 0
        %v690 = vsel %vm652, %v639, 0
        %v693 = vsel %vm652, %v640, 0
        %v696 = vsel %vm652, %v641, 0
        %v699 = vsel %vm652, %v642, 0
        %701 = vmatprep.subr.mxu0 0.0
        %702 = vmatpush1.msra.mxu0 %v643
        %703 = vmatprep.subr.mxu0 0.0
        %704 = vmatpush1.msra.mxu0 %v644
        %705 = vmatprep.subr.mxu0 0.0
        %706 = vmatpush1.msra.mxu0 0.0
        %707 = vmatprep.subr.mxu0 0.0
        %708 = vmatpush1.msra.mxu0 0.0
        %709 = vmatprep.subr.mxu0 0.0
        %710 = vmatpush1.msra.mxu0 0.0
        %711 = vmatprep.subr.mxu0 0.0
        %712 = vmatpush1.msra.mxu0 0.0
        %713 = vmatprep.subr.mxu0 0.0
        %714 = vmatpush1.msra.mxu0 0.0
        %715 = vmatprep.subr.mxu0 0.0
        %716 = vmatpush1.msra.mxu0 0.0
        %717 = vmatprep.subr.mxu0 0.0
        %718 = vmatpush1.msra.mxu0 0.0
        %719 = vmatprep.subr.mxu0 0.0
        %720 = vmatpush1.msra.mxu0 0.0
        %721 = vmatprep.subr.mxu0 0.0
        %722 = vmatpush1.msra.mxu0 0.0
        %723 = vmatprep.subr.mxu0 0.0
        %724 = vmatpush1.msra.mxu0 0.0
        %725 = vmatprep.subr.mxu0 0.0
        %726 = vmatpush1.msra.mxu0 0.0
        %727 = vmatprep.subr.mxu0 0.0
        %728 = vmatpush1.msra.mxu0 0.0
        %729 = vmatprep.subr.mxu0 0.0
        %730 = vmatpush1.msra.mxu0 0.0
        %731 = vmatprep.subr.mxu0 0.0
        %732 = vmatpush1.msra.mxu0 0.0
        %733 = vmatprep.subr.mxu0 0.0
        %734 = vmatpush1.msra.mxu0 0.0
        %735 = vmatprep.subr.mxu0 0.0
        %736 = vmatpush1.msra.mxu0 0.0
        %737 = vmatprep.subr.mxu0 0.0
        %738 = vmatpush1.msra.mxu0 0.0
        %739 = vmatprep.subr.mxu0 0.0
        %740 = vmatpush1.msra.mxu0 0.0
        %741 = vmatprep.subr.mxu0 0.0
        %742 = vmatpush1.msra.mxu0 0.0
        %743 = vmatprep.subr.mxu0 0.0
        %744 = vmatpush1.msra.mxu0 0.0
        %745 = vmatprep.subr.mxu0 0.0
        %746 = vmatpush1.msra.mxu0 0.0
        %747 = vmatprep.subr.mxu0 0.0
        %748 = vmatpush1.msra.mxu0 0.0
        %749 = vmatprep.subr.mxu0 0.0
        %750 = vmatpush1.msra.mxu0 0.0
        %751 = vmatprep.subr.mxu0 0.0
        %752 = vmatpush1.msra.mxu0 0.0
        %753 = vmatprep.subr.mxu0 0.0
        %754 = vmatpush1.msra.mxu0 0.0
        %755 = vmatprep.subr.mxu0 0.0
        %756 = vmatpush1.msra.mxu0 0.0
        %757 = vmatprep.subr.mxu0 0.0
        %758 = vmatpush1.msra.mxu0 0.0
        %759 = vmatprep.subr.mxu0 0.0
        %760 = vmatpush1.msra.mxu0 0.0
        %761 = vmatprep.subr.mxu0 0.0
        %762 = vmatpush1.msra.mxu0 0.0
        %763 = vmatprep.subr.mxu0 0.0
        %764 = vmatpush1.msra.mxu0 0.0
        %765 = vmatprep.mubr.f32.mxu0 0.0
        %766 = vmatmul.mubr.f32.gmra.mrb[0].mxu0 %v654
        %v767 = vpop.f32.mrb[0].mxu0
        %v768 = vadd.f32 %v650, %v767
        %v769 = vpop.f32.mrb[0].mxu0
        %770 = vmatprep.mubr.f32.mxu0 0.0
        %771 = vmatmul.mubr.f32.gmra.mrb[0].mxu0 %v657
        %v772 = vpop.f32.mrb[0].mxu0
        %v773 = vadd.f32 %v650, %v772
        %v774 = vpop.f32.mrb[0].mxu0
        %775 = vmatprep.mubr.f32.mxu0 0.0
        %776 = vmatmul.mubr.f32.gmra.mrb[0].mxu0 %v660
        %v777 = vpop.f32.mrb[0].mxu0
        %v778 = vadd.f32 %v650, %v777
        %v779 = vpop.f32.mrb[0].mxu0
        %780 = vmatprep.mubr.f32.mxu0 0.0
        %781 = vmatmul.mubr.f32.gmra.mrb[0].mxu0 %v663
        %v782 = vpop.f32.mrb[0].mxu0
        %v783 = vadd.f32 %v650, %v782
        %v784 = vpop.f32.mrb[0].mxu0
        %785 = vmatprep.mubr.f32.mxu0 0.0
        %786 = vmatmul.mubr.f32.gmra.mrb[0].mxu0 %v666
        %v787 = vpop.f32.mrb[0].mxu0
        %v788 = vadd.f32 %v650, %v787
        %v789 = vpop.f32.mrb[0].mxu0
        %790 = vmatprep.mubr.f32.mxu0 0.0
        %791 = vmatmul.mubr.f32.gmra.mrb[0].mxu0 %v669
        %v792 = vpop.f32.mrb[0].mxu0
        %v793 = vadd.f32 %v650, %v792
        %v794 = vpop.f32.mrb[0].mxu0
        %795 = vmatprep.mubr.f32.mxu0 0.0
        %796 = vmatmul.mubr.f32.gmra.mrb[0].mxu0 %v672
        %v797 = vpop.f32.mrb[0].mxu0
        %v798 = vadd.f32 %v650, %v797
        %v799 = vpop.f32.mrb[0].mxu0
        %800 = vmatprep.mubr.f32.mxu0 0.0
        %801 = vmatmul.mubr.f32.gmra.mrb[0].mxu0 %v675
        %v802 = vpop.f32.mrb[0].mxu0
        %v803 = vadd.f32 %v650, %v802
        %v804 = vpop.f32.mrb[0].mxu0
        %805 = vmatprep.mubr.f32.mxu0 0.0
        %806 = vmatmul.mubr.f32.gmra.mrb[0].mxu0 %v678
        %v807 = vpop.f32.mrb[0].mxu0
        %v808 = vadd.f32 %v650, %v807
        %v809 = vpop.f32.mrb[0].mxu0
        %810 = vmatprep.mubr.f32.mxu0 0.0
        %811 = vmatmul.mubr.f32.gmra.mrb[0].mxu0 %v681
        %v812 = vpop.f32.mrb[0].mxu0
        %v813 = vadd.f32 %v650, %v812
        %v814 = vpop.f32.mrb[0].mxu0
        %815 = vmatprep.mubr.f32.mxu0 0.0
        %816 = vmatmul.mubr.f32.gmra.mrb[0].mxu0 %v684
        %v817 = vpop.f32.mrb[0].mxu0
        %v818 = vadd.f32 %v650, %v817
        %v819 = vpop.f32.mrb[0].mxu0
        %820 = vmatprep.mubr.f32.mxu0 0.0
        %821 = vmatmul.mubr.f32.gmra.mrb[0].mxu0 %v687
        %v822 = vpop.f32.mrb[0].mxu0
        %v823 = vadd.f32 %v650, %v822
        %v824 = vpop.f32.mrb[0].mxu0
        %825 = vmatprep.mubr.f32.mxu0 0.0
        %826 = vmatmul.mubr.f32.gmra.mrb[0].mxu0 %v690
        %v827 = vpop.f32.mrb[0].mxu0
        %v828 = vadd.f32 %v650, %v827
        %v829 = vpop.f32.mrb[0].mxu0
        %830 = vmatprep.mubr.f32.mxu0 0.0
        %831 = vmatmul.mubr.f32.gmra.mrb[0].mxu0 %v693
        %v832 = vpop.f32.mrb[0].mxu0
        %v833 = vadd.f32 %v650, %v832
        %v834 = vpop.f32.mrb[0].mxu0
        %835 = vmatprep.mubr.f32.mxu0 0.0
        %836 = vmatmul.mubr.f32.gmra.mrb[0].mxu0 %v696
        %v837 = vpop.f32.mrb[0].mxu0
        %v838 = vadd.f32 %v650, %v837
        %v839 = vpop.f32.mrb[0].mxu0
        %840 = vmatprep.mubr.f32.mxu0 0.0
        %841 = vmatmul.mubr.f32.gmra.mrb[0].mxu0 %v699
        %v842 = vpop.f32.mrb[0].mxu0
        %v843 = vadd.f32 %v650, %v842
        %v844 = vpop.f32.mrb[0].mxu0
        %845 = vdwg.mxu0
        %v846 = vmax.f32 %v768, 0.0
        %v847 = vmax.f32 %v773, 0.0
        %v848 = vmax.f32 %v778, 0.0
        %v849 = vmax.f32 %v783, 0.0
        %v850 = vmax.f32 %v788, 0.0
        %v851 = vmax.f32 %v793, 0.0
        %v852 = vmax.f32 %v798, 0.0
        %v853 = vmax.f32 %v803, 0.0
        %v854 = vmax.f32 %v808, 0.0
        %v855 = vmax.f32 %v813, 0.0
        %v856 = vmax.f32 %v818, 0.0
        %v857 = vmax.f32 %v823, 0.0
        %v858 = vmax.f32 %v828, 0.0
        %v859 = vmax.f32 %v833, 0.0
        %v860 = vmax.f32 %v838, 0.0
        %v861 = vmax.f32 %v843, 0.0
        %v862 = vld [vmem:[%s3] sm:$0xff]
        %v863 = vld [vmem:[%s3 + $0x8] sm:$0xff]
        %v864 = vld [vmem:[%s3 + $0x10] sm:$0xff]
        %v865 = vld [vmem:[%s3 + $0x18] sm:$0xff]
        %v866 = vld [vmem:[%s3 + $0x20] sm:$0xff]
        %v867 = vld [vmem:[%s3 + $0x28] sm:$0xff]
        %v868 = vld [vmem:[%s3 + $0x30] sm:$0xff]
        %v869 = vld [vmem:[%s3 + $0x38] sm:$0xff]
        %v870 = vld [vmem:[%s3 + $0x40] sm:$0xff]
        %v871 = vld [vmem:[%s3 + $0x48] sm:$0xff]
        %v872 = vld [vmem:[%s3 + $0x50] sm:$0xff]
        %v873 = vld [vmem:[%s3 + $0x58] sm:$0xff]
        %v874 = vld [vmem:[%s3 + $0x60] sm:$0xff]
        %v875 = vld [vmem:[%s3 + $0x68] sm:$0xff]
        %v876 = vld [vmem:[%s3 + $0x70] sm:$0xff]
        %v877 = vld [vmem:[%s3 + $0x78] sm:$0xff]
        %v878 = vld [vmem:[%s4] sm:$0x1]
        %v880 = vlaneseq
        %v881 = vshrl.u32 %v880, 7
        %v882 = vsub.s32 0, %v881
        %v883 = vrot.slane %v878, %v882
        %885 = vmatprep.subr.mxu0 0.0
        %886 = vmatpush1.msra.mxu0 %v862
        %887 = vmatprep.subr.mxu0 0.0
        %888 = vmatpush1.msra.mxu0 %v863
        %889 = vmatprep.subr.mxu0 0.0
        %890 = vmatpush1.msra.mxu0 %v864
        %891 = vmatprep.subr.mxu0 0.0
        %892 = vmatpush1.msra.mxu0 %v865
        %893 = vmatprep.subr.mxu0 0.0
        %894 = vmatpush1.msra.mxu0 %v866
        %895 = vmatprep.subr.mxu0 0.0
        %896 = vmatpush1.msra.mxu0 %v867
        %897 = vmatprep.subr.mxu0 0.0
        %898 = vmatpush1.msra.mxu0 %v868
        %899 = vmatprep.subr.mxu0 0.0
        %900 = vmatpush1.msra.mxu0 %v869
        %901 = vmatprep.subr.mxu0 0.0
        %902 = vmatpush1.msra.mxu0 %v870
        %903 = vmatprep.subr.mxu0 0.0
        %904 = vmatpush1.msra.mxu0 %v871
        %905 = vmatprep.subr.mxu0 0.0
        %906 = vmatpush1.msra.mxu0 %v872
        %907 = vmatprep.subr.mxu0 0.0
        %908 = vmatpush1.msra.mxu0 %v873
        %909 = vmatprep.subr.mxu0 0.0
        %910 = vmatpush1.msra.mxu0 %v874
        %911 = vmatprep.subr.mxu0 0.0
        %912 = vmatpush1.msra.mxu0 %v875
        %913 = vmatprep.subr.mxu0 0.0
        %914 = vmatpush1.msra.mxu0 %v876
        %915 = vmatprep.subr.mxu0 0.0
        %916 = vmatpush1.msra.mxu0 %v877
        %917 = vmatprep.subr.mxu0 0.0
        %918 = vmatpush1.msra.mxu0 0.0
        %919 = vmatprep.subr.mxu0 0.0
        %920 = vmatpush1.msra.mxu0 0.0
        %921 = vmatprep.subr.mxu0 0.0
        %922 = vmatpush1.msra.mxu0 0.0
        %923 = vmatprep.subr.mxu0 0.0
        %924 = vmatpush1.msra.mxu0 0.0
        %925 = vmatprep.subr.mxu0 0.0
        %926 = vmatpush1.msra.mxu0 0.0
        %927 = vmatprep.subr.mxu0 0.0
        %928 = vmatpush1.msra.mxu0 0.0
        %929 = vmatprep.subr.mxu0 0.0
        %930 = vmatpush1.msra.mxu0 0.0
        %931 = vmatprep.subr.mxu0 0.0
        %932 = vmatpush1.msra.mxu0 0.0
        %933 = vmatprep.subr.mxu0 0.0
        %934 = vmatpush1.msra.mxu0 0.0
        %935 = vmatprep.subr.mxu0 0.0
        %936 = vmatpush1.msra.mxu0 0.0
        %937 = vmatprep.subr.mxu0 0.0
        %938 = vmatpush1.msra.mxu0 0.0
        %939 = vmatprep.subr.mxu0 0.0
        %940 = vmatpush1.msra.mxu0 0.0
        %941 = vmatprep.subr.mxu0 0.0
        %942 = vmatpush1.msra.mxu0 0.0
        %943 = vmatprep.subr.mxu0 0.0
        %944 = vmatpush1.msra.mxu0 0.0
        %945 = vmatprep.subr.mxu0 0.0
        %946 = vmatpush1.msra.mxu0 0.0
        %947 = vmatprep.subr.mxu0 0.0
        %948 = vmatpush1.msra.mxu0 0.0
        %949 = vmatprep.mubr.f32.mxu0 0.0
        %950 = vmatmul.mubr.f32.gmra.mrb[0].mxu0 %v846
        %v951 = vpop.f32.mrb[0].mxu0
        %v952 = vadd.f32 %v883, %v951
        %v953 = vpop.f32.mrb[0].mxu0
        %954 = vmatprep.mubr.f32.mxu0 0.0
        %955 = vmatmul.mubr.f32.gmra.mrb[0].mxu0 %v847
        %v956 = vpop.f32.mrb[0].mxu0
        %v957 = vadd.f32 %v883, %v956
        %v958 = vpop.f32.mrb[0].mxu0
        %959 = vmatprep.mubr.f32.mxu0 0.0
        %960 = vmatmul.mubr.f32.gmra.mrb[0].mxu0 %v848
        %v961 = vpop.f32.mrb[0].mxu0
        %v962 = vadd.f32 %v883, %v961
        %v963 = vpop.f32.mrb[0].mxu0
        %964 = vmatprep.mubr.f32.mxu0 0.0
        %965 = vmatmul.mubr.f32.gmra.mrb[0].mxu0 %v849
        %v966 = vpop.f32.mrb[0].mxu0
        %v967 = vadd.f32 %v883, %v966
        %v968 = vpop.f32.mrb[0].mxu0
        %969 = vmatprep.mubr.f32.mxu0 0.0
        %970 = vmatmul.mubr.f32.gmra.mrb[0].mxu0 %v850
        %v971 = vpop.f32.mrb[0].mxu0
        %v972 = vadd.f32 %v883, %v971
        %v973 = vpop.f32.mrb[0].mxu0
        %974 = vmatprep.mubr.f32.mxu0 0.0
        %975 = vmatmul.mubr.f32.gmra.mrb[0].mxu0 %v851
        %v976 = vpop.f32.mrb[0].mxu0
        %v977 = vadd.f32 %v883, %v976
        %v978 = vpop.f32.mrb[0].mxu0
        %979 = vmatprep.mubr.f32.mxu0 0.0
        %980 = vmatmul.mubr.f32.gmra.mrb[0].mxu0 %v852
        %v981 = vpop.f32.mrb[0].mxu0
        %v982 = vadd.f32 %v883, %v981
        %v983 = vpop.f32.mrb[0].mxu0
        %984 = vmatprep.mubr.f32.mxu0 0.0
        %985 = vmatmul.mubr.f32.gmra.mrb[0].mxu0 %v853
        %v986 = vpop.f32.mrb[0].mxu0
        %v987 = vadd.f32 %v883, %v986
        %v988 = vpop.f32.mrb[0].mxu0
        %989 = vmatprep.mubr.f32.mxu0 0.0
        %990 = vmatmul.mubr.f32.gmra.mrb[0].mxu0 %v854
        %v991 = vpop.f32.mrb[0].mxu0
        %v992 = vadd.f32 %v883, %v991
        %v993 = vpop.f32.mrb[0].mxu0
        %994 = vmatprep.mubr.f32.mxu0 0.0
        %995 = vmatmul.mubr.f32.gmra.mrb[0].mxu0 %v855
        %v996 = vpop.f32.mrb[0].mxu0
        %v997 = vadd.f32 %v883, %v996
        %v998 = vpop.f32.mrb[0].mxu0
        %999 = vmatprep.mubr.f32.mxu0 0.0
        %1000 = vmatmul.mubr.f32.gmra.mrb[0].mxu0 %v856
        %v1001 = vpop.f32.mrb[0].mxu0
        %v1002 = vadd.f32 %v883, %v1001
        %v1003 = vpop.f32.mrb[0].mxu0
        %1004 = vmatprep.mubr.f32.mxu0 0.0
        %1005 = vmatmul.mubr.f32.gmra.mrb[0].mxu0 %v857
        %v1006 = vpop.f32.mrb[0].mxu0
        %v1007 = vadd.f32 %v883, %v1006
        %v1008 = vpop.f32.mrb[0].mxu0
        %1009 = vmatprep.mubr.f32.mxu0 0.0
        %1010 = vmatmul.mubr.f32.gmra.mrb[0].mxu0 %v858
        %v1011 = vpop.f32.mrb[0].mxu0
        %v1012 = vadd.f32 %v883, %v1011
        %v1013 = vpop.f32.mrb[0].mxu0
        %1014 = vmatprep.mubr.f32.mxu0 0.0
        %1015 = vmatmul.mubr.f32.gmra.mrb[0].mxu0 %v859
        %v1016 = vpop.f32.mrb[0].mxu0
        %v1017 = vadd.f32 %v883, %v1016
        %v1018 = vpop.f32.mrb[0].mxu0
        %1019 = vmatprep.mubr.f32.mxu0 0.0
        %1020 = vmatmul.mubr.f32.gmra.mrb[0].mxu0 %v860
        %v1021 = vpop.f32.mrb[0].mxu0
        %v1022 = vadd.f32 %v883, %v1021
        %v1023 = vpop.f32.mrb[0].mxu0
        %1024 = vmatprep.mubr.f32.mxu0 0.0
        %1025 = vmatmul.mubr.f32.gmra.mrb[0].mxu0 %v861
        %v1026 = vpop.f32.mrb[0].mxu0
        %v1027 = vadd.f32 %v883, %v1026
        %v1028 = vpop.f32.mrb[0].mxu0
        %1029 = vdwg.mxu0
        %v1030 = vmax.f32 %v952, 0.0
        %v1031 = vmax.f32 %v957, 0.0
        %v1032 = vmax.f32 %v962, 0.0
        %v1033 = vmax.f32 %v967, 0.0
        %v1034 = vmax.f32 %v972, 0.0
        %v1035 = vmax.f32 %v977, 0.0
        %v1036 = vmax.f32 %v982, 0.0
        %v1037 = vmax.f32 %v987, 0.0
        %v1038 = vmax.f32 %v992, 0.0
        %v1039 = vmax.f32 %v997, 0.0
        %v1040 = vmax.f32 %v1002, 0.0
        %v1041 = vmax.f32 %v1007, 0.0
        %v1042 = vmax.f32 %v1012, 0.0
        %v1043 = vmax.f32 %v1017, 0.0
        %v1044 = vmax.f32 %v1022, 0.0
        %v1045 = vmax.f32 %v1027, 0.0
        %v1046 = vld [vmem:[%s5] sm:$0xff]
        %v1047 = vld [vmem:[%s5 + $0x8] sm:$0xff]
        %v1048 = vld [vmem:[%s5 + $0x10] sm:$0xff]
        %v1049 = vld [vmem:[%s5 + $0x18] sm:$0xff]
        %v1050 = vld [vmem:[%s5 + $0x20] sm:$0xff]
        %v1051 = vld [vmem:[%s5 + $0x28] sm:$0xff]
        %v1052 = vld [vmem:[%s5 + $0x30] sm:$0xff]
        %v1053 = vld [vmem:[%s5 + $0x38] sm:$0xff]
        %v1054 = vld [vmem:[%s5 + $0x40] sm:$0xff]
        %v1055 = vld [vmem:[%s5 + $0x48] sm:$0xff]
        %v1056 = vld [vmem:[%s5 + $0x50] sm:$0xff]
        %v1057 = vld [vmem:[%s5 + $0x58] sm:$0xff]
        %v1058 = vld [vmem:[%s5 + $0x60] sm:$0xff]
        %v1059 = vld [vmem:[%s5 + $0x68] sm:$0xff]
        %v1060 = vld [vmem:[%s5 + $0x70] sm:$0xff]
        %v1061 = vld [vmem:[%s5 + $0x78] sm:$0xff]
        %v1062 = vld [vmem:[%s6] sm:$0x1]
        %v1064 = vlaneseq
        %v1065 = vshrl.u32 %v1064, 7
        %v1066 = vsub.s32 0, %v1065
        %v1067 = vrot.slane %v1062, %v1066
        %1069 = vmatprep.subr.mxu0 0.0
        %1070 = vmatpush1.msra.mxu0 %v1046
        %1071 = vmatprep.subr.mxu0 0.0
        %1072 = vmatpush1.msra.mxu0 %v1047
        %1073 = vmatprep.subr.mxu0 0.0
        %1074 = vmatpush1.msra.mxu0 %v1048
        %1075 = vmatprep.subr.mxu0 0.0
        %1076 = vmatpush1.msra.mxu0 %v1049
        %1077 = vmatprep.subr.mxu0 0.0
        %1078 = vmatpush1.msra.mxu0 %v1050
        %1079 = vmatprep.subr.mxu0 0.0
        %1080 = vmatpush1.msra.mxu0 %v1051
        %1081 = vmatprep.subr.mxu0 0.0
        %1082 = vmatpush1.msra.mxu0 %v1052
        %1083 = vmatprep.subr.mxu0 0.0
        %1084 = vmatpush1.msra.mxu0 %v1053
        %1085 = vmatprep.subr.mxu0 0.0
        %1086 = vmatpush1.msra.mxu0 %v1054
        %1087 = vmatprep.subr.mxu0 0.0
        %1088 = vmatpush1.msra.mxu0 %v1055
        %1089 = vmatprep.subr.mxu0 0.0
        %1090 = vmatpush1.msra.mxu0 %v1056
        %1091 = vmatprep.subr.mxu0 0.0
        %1092 = vmatpush1.msra.mxu0 %v1057
        %1093 = vmatprep.subr.mxu0 0.0
        %1094 = vmatpush1.msra.mxu0 %v1058
        %1095 = vmatprep.subr.mxu0 0.0
        %1096 = vmatpush1.msra.mxu0 %v1059
        %1097 = vmatprep.subr.mxu0 0.0
        %1098 = vmatpush1.msra.mxu0 %v1060
        %1099 = vmatprep.subr.mxu0 0.0
        %1100 = vmatpush1.msra.mxu0 %v1061
        %1101 = vmatprep.subr.mxu0 0.0
        %1102 = vmatpush1.msra.mxu0 0.0
        %1103 = vmatprep.subr.mxu0 0.0
        %1104 = vmatpush1.msra.mxu0 0.0
        %1105 = vmatprep.subr.mxu0 0.0
        %1106 = vmatpush1.msra.mxu0 0.0
        %1107 = vmatprep.subr.mxu0 0.0
        %1108 = vmatpush1.msra.mxu0 0.0
        %1109 = vmatprep.subr.mxu0 0.0
        %1110 = vmatpush1.msra.mxu0 0.0
        %1111 = vmatprep.subr.mxu0 0.0
        %1112 = vmatpush1.msra.mxu0 0.0
        %1113 = vmatprep.subr.mxu0 0.0
        %1114 = vmatpush1.msra.mxu0 0.0
        %1115 = vmatprep.subr.mxu0 0.0
        %1116 = vmatpush1.msra.mxu0 0.0
        %1117 = vmatprep.subr.mxu0 0.0
        %1118 = vmatpush1.msra.mxu0 0.0
        %1119 = vmatprep.subr.mxu0 0.0
        %1120 = vmatpush1.msra.mxu0 0.0
        %1121 = vmatprep.subr.mxu0 0.0
        %1122 = vmatpush1.msra.mxu0 0.0
        %1123 = vmatprep.subr.mxu0 0.0
        %1124 = vmatpush1.msra.mxu0 0.0
        %1125 = vmatprep.subr.mxu0 0.0
        %1126 = vmatpush1.msra.mxu0 0.0
        %1127 = vmatprep.subr.mxu0 0.0
        %1128 = vmatpush1.msra.mxu0 0.0
        %1129 = vmatprep.subr.mxu0 0.0
        %1130 = vmatpush1.msra.mxu0 0.0
        %1131 = vmatprep.subr.mxu0 0.0
        %1132 = vmatpush1.msra.mxu0 0.0
        %1133 = vmatprep.mubr.f32.mxu0 0.0
        %1134 = vmatmul.mubr.f32.gmra.mrb[0].mxu0 %v1030
        %v1135 = vpop.f32.mrb[0].mxu0
        %v1136 = vadd.f32 %v1067, %v1135
        %v1137 = vpop.f32.mrb[0].mxu0
        %1138 = vmatprep.mubr.f32.mxu0 0.0
        %1139 = vmatmul.mubr.f32.gmra.mrb[0].mxu0 %v1031
        %v1140 = vpop.f32.mrb[0].mxu0
        %v1141 = vadd.f32 %v1067, %v1140
        %v1142 = vpop.f32.mrb[0].mxu0
        %1143 = vmatprep.mubr.f32.mxu0 0.0
        %1144 = vmatmul.mubr.f32.gmra.mrb[0].mxu0 %v1032
        %v1145 = vpop.f32.mrb[0].mxu0
        %v1146 = vadd.f32 %v1067, %v1145
        %v1147 = vpop.f32.mrb[0].mxu0
        %1148 = vmatprep.mubr.f32.mxu0 0.0
        %1149 = vmatmul.mubr.f32.gmra.mrb[0].mxu0 %v1033
        %v1150 = vpop.f32.mrb[0].mxu0
        %v1151 = vadd.f32 %v1067, %v1150
        %v1152 = vpop.f32.mrb[0].mxu0
        %1153 = vmatprep.mubr.f32.mxu0 0.0
        %1154 = vmatmul.mubr.f32.gmra.mrb[0].mxu0 %v1034
        %v1155 = vpop.f32.mrb[0].mxu0
        %v1156 = vadd.f32 %v1067, %v1155
        %v1157 = vpop.f32.mrb[0].mxu0
        %1158 = vmatprep.mubr.f32.mxu0 0.0
        %1159 = vmatmul.mubr.f32.gmra.mrb[0].mxu0 %v1035
        %v1160 = vpop.f32.mrb[0].mxu0
        %v1161 = vadd.f32 %v1067, %v1160
        %v1162 = vpop.f32.mrb[0].mxu0
        %1163 = vmatprep.mubr.f32.mxu0 0.0
        %1164 = vmatmul.mubr.f32.gmra.mrb[0].mxu0 %v1036
        %v1165 = vpop.f32.mrb[0].mxu0
        %v1166 = vadd.f32 %v1067, %v1165
        %v1167 = vpop.f32.mrb[0].mxu0
        %1168 = vmatprep.mubr.f32.mxu0 0.0
        %1169 = vmatmul.mubr.f32.gmra.mrb[0].mxu0 %v1037
        %v1170 = vpop.f32.mrb[0].mxu0
        %v1171 = vadd.f32 %v1067, %v1170
        %v1172 = vpop.f32.mrb[0].mxu0
        %1173 = vmatprep.mubr.f32.mxu0 0.0
        %1174 = vmatmul.mubr.f32.gmra.mrb[0].mxu0 %v1038
        %v1175 = vpop.f32.mrb[0].mxu0
        %v1176 = vadd.f32 %v1067, %v1175
        %v1177 = vpop.f32.mrb[0].mxu0
        %1178 = vmatprep.mubr.f32.mxu0 0.0
        %1179 = vmatmul.mubr.f32.gmra.mrb[0].mxu0 %v1039
        %v1180 = vpop.f32.mrb[0].mxu0
        %v1181 = vadd.f32 %v1067, %v1180
        %v1182 = vpop.f32.mrb[0].mxu0
        %1183 = vmatprep.mubr.f32.mxu0 0.0
        %1184 = vmatmul.mubr.f32.gmra.mrb[0].mxu0 %v1040
        %v1185 = vpop.f32.mrb[0].mxu0
        %v1186 = vadd.f32 %v1067, %v1185
        %v1187 = vpop.f32.mrb[0].mxu0
        %1188 = vmatprep.mubr.f32.mxu0 0.0
        %1189 = vmatmul.mubr.f32.gmra.mrb[0].mxu0 %v1041
        %v1190 = vpop.f32.mrb[0].mxu0
        %v1191 = vadd.f32 %v1067, %v1190
        %v1192 = vpop.f32.mrb[0].mxu0
        %1193 = vmatprep.mubr.f32.mxu0 0.0
        %1194 = vmatmul.mubr.f32.gmra.mrb[0].mxu0 %v1042
        %v1195 = vpop.f32.mrb[0].mxu0
        %v1196 = vadd.f32 %v1067, %v1195
        %v1197 = vpop.f32.mrb[0].mxu0
        %1198 = vmatprep.mubr.f32.mxu0 0.0
        %1199 = vmatmul.mubr.f32.gmra.mrb[0].mxu0 %v1043
        %v1200 = vpop.f32.mrb[0].mxu0
        %v1201 = vadd.f32 %v1067, %v1200
        %v1202 = vpop.f32.mrb[0].mxu0
        %1203 = vmatprep.mubr.f32.mxu0 0.0
        %1204 = vmatmul.mubr.f32.gmra.mrb[0].mxu0 %v1044
        %v1205 = vpop.f32.mrb[0].mxu0
        %v1206 = vadd.f32 %v1067, %v1205
        %v1207 = vpop.f32.mrb[0].mxu0
        %1208 = vmatprep.mubr.f32.mxu0 0.0
        %1209 = vmatmul.mubr.f32.gmra.mrb[0].mxu0 %v1045
        %v1210 = vpop.f32.mrb[0].mxu0
        %v1211 = vadd.f32 %v1067, %v1210
        %v1212 = vpop.f32.mrb[0].mxu0
        %1213 = vdwg.mxu0
        %v1214 = vmax.f32 %v1136, 0.0
        %v1215 = vmax.f32 %v1141, 0.0
        %v1216 = vmax.f32 %v1146, 0.0
        %v1217 = vmax.f32 %v1151, 0.0
        %v1218 = vmax.f32 %v1156, 0.0
        %v1219 = vmax.f32 %v1161, 0.0
        %v1220 = vmax.f32 %v1166, 0.0
        %v1221 = vmax.f32 %v1171, 0.0
        %v1222 = vmax.f32 %v1176, 0.0
        %v1223 = vmax.f32 %v1181, 0.0
        %v1224 = vmax.f32 %v1186, 0.0
        %v1225 = vmax.f32 %v1191, 0.0
        %v1226 = vmax.f32 %v1196, 0.0
        %v1227 = vmax.f32 %v1201, 0.0
        %v1228 = vmax.f32 %v1206, 0.0
        %v1229 = vmax.f32 %v1211, 0.0
        %v1230 = vld [vmem:[#allocation2] sm:$0xff]
        %v1231 = vld [vmem:[#allocation2 + $0x8] sm:$0xff]
        %v1232 = vld [vmem:[#allocation2 + $0x10] sm:$0xff]
        %v1233 = vld [vmem:[#allocation2 + $0x18] sm:$0xff]
        %v1234 = vld [vmem:[#allocation2 + $0x20] sm:$0xff]
        %v1235 = vld [vmem:[#allocation2 + $0x28] sm:$0xff]
        %v1236 = vld [vmem:[#allocation2 + $0x30] sm:$0xff]
        %v1237 = vld [vmem:[#allocation2 + $0x38] sm:$0xff]
        %v1238 = vld [vmem:[#allocation2 + $0x40] sm:$0xff]
        %v1239 = vld [vmem:[#allocation2 + $0x48] sm:$0xff]
        %v1240 = vld [vmem:[#allocation2 + $0x50] sm:$0xff]
        %v1241 = vld [vmem:[#allocation2 + $0x58] sm:$0xff]
        %v1242 = vld [vmem:[#allocation2 + $0x60] sm:$0xff]
        %v1243 = vld [vmem:[#allocation2 + $0x68] sm:$0xff]
        %v1244 = vld [vmem:[#allocation2 + $0x70] sm:$0xff]
        %v1245 = vld [vmem:[#allocation2 + $0x78] sm:$0xff]
        %v1246 = vld [vmem:[%s8] sm:$0x1]
        %v1248 = vlaneseq
        %v1249 = vshrl.u32 %v1248, 7
        %v1250 = vsub.s32 0, %v1249
        %v1251 = vrot.slane %v1246, %v1250
        %1253 = vmatprep.subr.mxu0 0.0
        %1254 = vmatpush1.msra.mxu0 %v1230
        %1255 = vmatprep.subr.mxu0 0.0
        %1256 = vmatpush1.msra.mxu0 %v1231
        %1257 = vmatprep.subr.mxu0 0.0
        %1258 = vmatpush1.msra.mxu0 %v1232
        %1259 = vmatprep.subr.mxu0 0.0
        %1260 = vmatpush1.msra.mxu0 %v1233
        %1261 = vmatprep.subr.mxu0 0.0
        %1262 = vmatpush1.msra.mxu0 %v1234
        %1263 = vmatprep.subr.mxu0 0.0
        %1264 = vmatpush1.msra.mxu0 %v1235
        %1265 = vmatprep.subr.mxu0 0.0
        %1266 = vmatpush1.msra.mxu0 %v1236
        %1267 = vmatprep.subr.mxu0 0.0
        %1268 = vmatpush1.msra.mxu0 %v1237
        %1269 = vmatprep.subr.mxu0 0.0
        %1270 = vmatpush1.msra.mxu0 %v1238
        %1271 = vmatprep.subr.mxu0 0.0
        %1272 = vmatpush1.msra.mxu0 %v1239
        %1273 = vmatprep.subr.mxu0 0.0
        %1274 = vmatpush1.msra.mxu0 %v1240
        %1275 = vmatprep.subr.mxu0 0.0
        %1276 = vmatpush1.msra.mxu0 %v1241
        %1277 = vmatprep.subr.mxu0 0.0
        %1278 = vmatpush1.msra.mxu0 %v1242
        %1279 = vmatprep.subr.mxu0 0.0
        %1280 = vmatpush1.msra.mxu0 %v1243
        %1281 = vmatprep.subr.mxu0 0.0
        %1282 = vmatpush1.msra.mxu0 %v1244
        %1283 = vmatprep.subr.mxu0 0.0
        %1284 = vmatpush1.msra.mxu0 %v1245
        %1285 = vmatprep.subr.mxu0 0.0
        %1286 = vmatpush1.msra.mxu0 0.0
        %1287 = vmatprep.subr.mxu0 0.0
        %1288 = vmatpush1.msra.mxu0 0.0
        %1289 = vmatprep.subr.mxu0 0.0
        %1290 = vmatpush1.msra.mxu0 0.0
        %1291 = vmatprep.subr.mxu0 0.0
        %1292 = vmatpush1.msra.mxu0 0.0
        %1293 = vmatprep.subr.mxu0 0.0
        %1294 = vmatpush1.msra.mxu0 0.0
        %1295 = vmatprep.subr.mxu0 0.0
        %1296 = vmatpush1.msra.mxu0 0.0
        %1297 = vmatprep.subr.mxu0 0.0
        %1298 = vmatpush1.msra.mxu0 0.0
        %1299 = vmatprep.subr.mxu0 0.0
        %1300 = vmatpush1.msra.mxu0 0.0
        %1301 = vmatprep.subr.mxu0 0.0
        %1302 = vmatpush1.msra.mxu0 0.0
        %1303 = vmatprep.subr.mxu0 0.0
        %1304 = vmatpush1.msra.mxu0 0.0
        %1305 = vmatprep.subr.mxu0 0.0
        %1306 = vmatpush1.msra.mxu0 0.0
        %1307 = vmatprep.subr.mxu0 0.0
        %1308 = vmatpush1.msra.mxu0 0.0
        %1309 = vmatprep.subr.mxu0 0.0
        %1310 = vmatpush1.msra.mxu0 0.0
        %1311 = vmatprep.subr.mxu0 0.0
        %1312 = vmatpush1.msra.mxu0 0.0
        %1313 = vmatprep.subr.mxu0 0.0
        %1314 = vmatpush1.msra.mxu0 0.0
        %1315 = vmatprep.subr.mxu0 0.0
        %1316 = vmatpush1.msra.mxu0 0.0
        %1317 = vmatprep.mubr.f32.mxu0 0.0
        %1318 = vmatmul.mubr.f32.gmra.mrb[0].mxu0 %v1214
        %v1319 = vpop.f32.mrb[0].mxu0
        %v1320 = vadd.f32 %v1251, %v1319
        %v1321 = vpop.f32.mrb[0].mxu0
        %1322 = vmatprep.mubr.f32.mxu0 0.0
        %1323 = vmatmul.mubr.f32.gmra.mrb[0].mxu0 %v1215
        %v1324 = vpop.f32.mrb[0].mxu0
        %v1325 = vadd.f32 %v1251, %v1324
        %v1326 = vpop.f32.mrb[0].mxu0
        %1327 = vmatprep.mubr.f32.mxu0 0.0
        %1328 = vmatmul.mubr.f32.gmra.mrb[0].mxu0 %v1216
        %v1329 = vpop.f32.mrb[0].mxu0
        %v1330 = vadd.f32 %v1251, %v1329
        %v1331 = vpop.f32.mrb[0].mxu0
        %1332 = vmatprep.mubr.f32.mxu0 0.0
        %1333 = vmatmul.mubr.f32.gmra.mrb[0].mxu0 %v1217
        %v1334 = vpop.f32.mrb[0].mxu0
        %v1335 = vadd.f32 %v1251, %v1334
        %v1336 = vpop.f32.mrb[0].mxu0
        %1337 = vmatprep.mubr.f32.mxu0 0.0
        %1338 = vmatmul.mubr.f32.gmra.mrb[0].mxu0 %v1218
        %v1339 = vpop.f32.mrb[0].mxu0
        %v1340 = vadd.f32 %v1251, %v1339
        %v1341 = vpop.f32.mrb[0].mxu0
        %1342 = vmatprep.mubr.f32.mxu0 0.0
        %1343 = vmatmul.mubr.f32.gmra.mrb[0].mxu0 %v1219
        %v1344 = vpop.f32.mrb[0].mxu0
        %v1345 = vadd.f32 %v1251, %v1344
        %v1346 = vpop.f32.mrb[0].mxu0
        %1347 = vmatprep.mubr.f32.mxu0 0.0
        %1348 = vmatmul.mubr.f32.gmra.mrb[0].mxu0 %v1220
        %v1349 = vpop.f32.mrb[0].mxu0
        %v1350 = vadd.f32 %v1251, %v1349
        %v1351 = vpop.f32.mrb[0].mxu0
        %1352 = vmatprep.mubr.f32.mxu0 0.0
        %1353 = vmatmul.mubr.f32.gmra.mrb[0].mxu0 %v1221
        %v1354 = vpop.f32.mrb[0].mxu0
        %v1355 = vadd.f32 %v1251, %v1354
        %v1356 = vpop.f32.mrb[0].mxu0
        %1357 = vmatprep.mubr.f32.mxu0 0.0
        %1358 = vmatmul.mubr.f32.gmra.mrb[0].mxu0 %v1222
        %v1359 = vpop.f32.mrb[0].mxu0
        %v1360 = vadd.f32 %v1251, %v1359
        %v1361 = vpop.f32.mrb[0].mxu0
        %1362 = vmatprep.mubr.f32.mxu0 0.0
        %1363 = vmatmul.mubr.f32.gmra.mrb[0].mxu0 %v1223
        %v1364 = vpop.f32.mrb[0].mxu0
        %v1365 = vadd.f32 %v1251, %v1364
        %v1366 = vpop.f32.mrb[0].mxu0
        %1367 = vmatprep.mubr.f32.mxu0 0.0
        %1368 = vmatmul.mubr.f32.gmra.mrb[0].mxu0 %v1224
        %v1369 = vpop.f32.mrb[0].mxu0
        %v1370 = vadd.f32 %v1251, %v1369
        %v1371 = vpop.f32.mrb[0].mxu0
        %1372 = vmatprep.mubr.f32.mxu0 0.0
        %1373 = vmatmul.mubr.f32.gmra.mrb[0].mxu0 %v1225
        %v1374 = vpop.f32.mrb[0].mxu0
        %v1375 = vadd.f32 %v1251, %v1374
        %v1376 = vpop.f32.mrb[0].mxu0
        %1377 = vmatprep.mubr.f32.mxu0 0.0
        %1378 = vmatmul.mubr.f32.gmra.mrb[0].mxu0 %v1226
        %v1379 = vpop.f32.mrb[0].mxu0
        %v1380 = vadd.f32 %v1251, %v1379
        %v1381 = vpop.f32.mrb[0].mxu0
        %1382 = vmatprep.mubr.f32.mxu0 0.0
        %1383 = vmatmul.mubr.f32.gmra.mrb[0].mxu0 %v1227
        %v1384 = vpop.f32.mrb[0].mxu0
        %v1385 = vadd.f32 %v1251, %v1384
        %v1386 = vpop.f32.mrb[0].mxu0
        %1387 = vmatprep.mubr.f32.mxu0 0.0
        %1388 = vmatmul.mubr.f32.gmra.mrb[0].mxu0 %v1228
        %v1389 = vpop.f32.mrb[0].mxu0
        %v1390 = vadd.f32 %v1251, %v1389
        %v1391 = vpop.f32.mrb[0].mxu0
        %1392 = vmatprep.mubr.f32.mxu0 0.0
        %1393 = vmatmul.mubr.f32.gmra.mrb[0].mxu0 %v1229
        %v1394 = vpop.f32.mrb[0].mxu0
        %v1395 = vadd.f32 %v1251, %v1394
        %v1396 = vpop.f32.mrb[0].mxu0
        %1397 = vdwg.mxu0
        %v1398 = vld [vmem:[#allocation4] sm:$0xff]
        %v1399 = vld [vmem:[#allocation4 + $0x8] sm:$0xff]
        %v1400 = vld [vmem:[#allocation4 + $0x10] sm:$0xff]
        %v1401 = vld [vmem:[#allocation4 + $0x18] sm:$0xff]
        %v1402 = vld [vmem:[#allocation4 + $0x20] sm:$0xff]
        %v1403 = vld [vmem:[#allocation4 + $0x28] sm:$0xff]
        %v1404 = vld [vmem:[#allocation4 + $0x30] sm:$0xff]
        %v1405 = vld [vmem:[#allocation4 + $0x38] sm:$0xff]
        %v1406 = vld [vmem:[#allocation4 + $0x40] sm:$0xff]
        %v1407 = vld [vmem:[#allocation4 + $0x48] sm:$0xff]
        %v1408 = vld [vmem:[#allocation4 + $0x50] sm:$0xff]
        %v1409 = vld [vmem:[#allocation4 + $0x58] sm:$0xff]
        %v1410 = vld [vmem:[#allocation4 + $0x60] sm:$0xff]
        %v1411 = vld [vmem:[#allocation4 + $0x68] sm:$0xff]
        %v1412 = vld [vmem:[#allocation4 + $0x70] sm:$0xff]
        %v1413 = vld [vmem:[#allocation4 + $0x78] sm:$0xff]
        %v1414 = vld [vmem:[%s10] sm:$0x1]
        %v1416 = vlaneseq
        %v1417 = vshrl.u32 %v1416, 7
        %v1418 = vsub.s32 0, %v1417
        %v1419 = vrot.slane %v1414, %v1418
        %1421 = vmatprep.subr.mxu0 0.0
        %1422 = vmatpush1.msra.mxu0 %v1398
        %1423 = vmatprep.subr.mxu0 0.0
        %1424 = vmatpush1.msra.mxu0 %v1399
        %1425 = vmatprep.subr.mxu0 0.0
        %1426 = vmatpush1.msra.mxu0 %v1400
        %1427 = vmatprep.subr.mxu0 0.0
        %1428 = vmatpush1.msra.mxu0 %v1401
        %1429 = vmatprep.subr.mxu0 0.0
        %1430 = vmatpush1.msra.mxu0 %v1402
        %1431 = vmatprep.subr.mxu0 0.0
        %1432 = vmatpush1.msra.mxu0 %v1403
        %1433 = vmatprep.subr.mxu0 0.0
        %1434 = vmatpush1.msra.mxu0 %v1404
        %1435 = vmatprep.subr.mxu0 0.0
        %1436 = vmatpush1.msra.mxu0 %v1405
        %1437 = vmatprep.subr.mxu0 0.0
        %1438 = vmatpush1.msra.mxu0 %v1406
        %1439 = vmatprep.subr.mxu0 0.0
        %1440 = vmatpush1.msra.mxu0 %v1407
        %1441 = vmatprep.subr.mxu0 0.0
        %1442 = vmatpush1.msra.mxu0 %v1408
        %1443 = vmatprep.subr.mxu0 0.0
        %1444 = vmatpush1.msra.mxu0 %v1409
        %1445 = vmatprep.subr.mxu0 0.0
        %1446 = vmatpush1.msra.mxu0 %v1410
        %1447 = vmatprep.subr.mxu0 0.0
        %1448 = vmatpush1.msra.mxu0 %v1411
        %1449 = vmatprep.subr.mxu0 0.0
        %1450 = vmatpush1.msra.mxu0 %v1412
        %1451 = vmatprep.subr.mxu0 0.0
        %1452 = vmatpush1.msra.mxu0 %v1413
        %1453 = vmatprep.subr.mxu0 0.0
        %1454 = vmatpush1.msra.mxu0 0.0
        %1455 = vmatprep.subr.mxu0 0.0
        %1456 = vmatpush1.msra.mxu0 0.0
        %1457 = vmatprep.subr.mxu0 0.0
        %1458 = vmatpush1.msra.mxu0 0.0
        %1459 = vmatprep.subr.mxu0 0.0
        %1460 = vmatpush1.msra.mxu0 0.0
        %1461 = vmatprep.subr.mxu0 0.0
        %1462 = vmatpush1.msra.mxu0 0.0
        %1463 = vmatprep.subr.mxu0 0.0
        %1464 = vmatpush1.msra.mxu0 0.0
        %1465 = vmatprep.subr.mxu0 0.0
        %1466 = vmatpush1.msra.mxu0 0.0
        %1467 = vmatprep.subr.mxu0 0.0
        %1468 = vmatpush1.msra.mxu0 0.0
        %1469 = vmatprep.subr.mxu0 0.0
        %1470 = vmatpush1.msra.mxu0 0.0
        %1471 = vmatprep.subr.mxu0 0.0
        %1472 = vmatpush1.msra.mxu0 0.0
        %1473 = vmatprep.subr.mxu0 0.0
        %1474 = vmatpush1.msra.mxu0 0.0
        %1475 = vmatprep.subr.mxu0 0.0
        %1476 = vmatpush1.msra.mxu0 0.0
        %1477 = vmatprep.subr.mxu0 0.0
        %1478 = vmatpush1.msra.mxu0 0.0
        %1479 = vmatprep.subr.mxu0 0.0
        %1480 = vmatpush1.msra.mxu0 0.0
        %1481 = vmatprep.subr.mxu0 0.0
        %1482 = vmatpush1.msra.mxu0 0.0
        %1483 = vmatprep.subr.mxu0 0.0
        %1484 = vmatpush1.msra.mxu0 0.0
        %1485 = vmatprep.mubr.f32.mxu0 0.0
        %1486 = vmatmul.mubr.f32.gmra.mrb[0].mxu0 %v1320
        %v1487 = vpop.f32.mrb[0].mxu0
        %v1488 = vadd.f32 %v1419, %v1487
        %v1489 = vpop.f32.mrb[0].mxu0
        %1490 = vmatprep.mubr.f32.mxu0 0.0
        %1491 = vmatmul.mubr.f32.gmra.mrb[0].mxu0 %v1325
        %v1492 = vpop.f32.mrb[0].mxu0
        %v1493 = vadd.f32 %v1419, %v1492
        %v1494 = vpop.f32.mrb[0].mxu0
        %1495 = vmatprep.mubr.f32.mxu0 0.0
        %1496 = vmatmul.mubr.f32.gmra.mrb[0].mxu0 %v1330
        %v1497 = vpop.f32.mrb[0].mxu0
        %v1498 = vadd.f32 %v1419, %v1497
        %v1499 = vpop.f32.mrb[0].mxu0
        %1500 = vmatprep.mubr.f32.mxu0 0.0
        %1501 = vmatmul.mubr.f32.gmra.mrb[0].mxu0 %v1335
        %v1502 = vpop.f32.mrb[0].mxu0
        %v1503 = vadd.f32 %v1419, %v1502
        %v1504 = vpop.f32.mrb[0].mxu0
        %1505 = vmatprep.mubr.f32.mxu0 0.0
        %1506 = vmatmul.mubr.f32.gmra.mrb[0].mxu0 %v1340
        %v1507 = vpop.f32.mrb[0].mxu0
        %v1508 = vadd.f32 %v1419, %v1507
        %v1509 = vpop.f32.mrb[0].mxu0
        %1510 = vmatprep.mubr.f32.mxu0 0.0
        %1511 = vmatmul.mubr.f32.gmra.mrb[0].mxu0 %v1345
        %v1512 = vpop.f32.mrb[0].mxu0
        %v1513 = vadd.f32 %v1419, %v1512
        %v1514 = vpop.f32.mrb[0].mxu0
        %1515 = vmatprep.mubr.f32.mxu0 0.0
        %1516 = vmatmul.mubr.f32.gmra.mrb[0].mxu0 %v1350
        %v1517 = vpop.f32.mrb[0].mxu0
        %v1518 = vadd.f32 %v1419, %v1517
        %v1519 = vpop.f32.mrb[0].mxu0
        %1520 = vmatprep.mubr.f32.mxu0 0.0
        %1521 = vmatmul.mubr.f32.gmra.mrb[0].mxu0 %v1355
        %v1522 = vpop.f32.mrb[0].mxu0
        %v1523 = vadd.f32 %v1419, %v1522
        %v1524 = vpop.f32.mrb[0].mxu0
        %1525 = vmatprep.mubr.f32.mxu0 0.0
        %1526 = vmatmul.mubr.f32.gmra.mrb[0].mxu0 %v1360
        %v1527 = vpop.f32.mrb[0].mxu0
        %v1528 = vadd.f32 %v1419, %v1527
        %v1529 = vpop.f32.mrb[0].mxu0
        %1530 = vmatprep.mubr.f32.mxu0 0.0
        %1531 = vmatmul.mubr.f32.gmra.mrb[0].mxu0 %v1365
        %v1532 = vpop.f32.mrb[0].mxu0
        %v1533 = vadd.f32 %v1419, %v1532
        %v1534 = vpop.f32.mrb[0].mxu0
        %1535 = vmatprep.mubr.f32.mxu0 0.0
        %1536 = vmatmul.mubr.f32.gmra.mrb[0].mxu0 %v1370
        %v1537 = vpop.f32.mrb[0].mxu0
        %v1538 = vadd.f32 %v1419, %v1537
        %v1539 = vpop.f32.mrb[0].mxu0
        %1540 = vmatprep.mubr.f32.mxu0 0.0
        %1541 = vmatmul.mubr.f32.gmra.mrb[0].mxu0 %v1375
        %v1542 = vpop.f32.mrb[0].mxu0
        %v1543 = vadd.f32 %v1419, %v1542
        %v1544 = vpop.f32.mrb[0].mxu0
        %1545 = vmatprep.mubr.f32.mxu0 0.0
        %1546 = vmatmul.mubr.f32.gmra.mrb[0].mxu0 %v1380
        %v1547 = vpop.f32.mrb[0].mxu0
        %v1548 = vadd.f32 %v1419, %v1547
        %v1549 = vpop.f32.mrb[0].mxu0
        %1550 = vmatprep.mubr.f32.mxu0 0.0
        %1551 = vmatmul.mubr.f32.gmra.mrb[0].mxu0 %v1385
        %v1552 = vpop.f32.mrb[0].mxu0
        %v1553 = vadd.f32 %v1419, %v1552
        %v1554 = vpop.f32.mrb[0].mxu0
        %1555 = vmatprep.mubr.f32.mxu0 0.0
        %1556 = vmatmul.mubr.f32.gmra.mrb[0].mxu0 %v1390
        %v1557 = vpop.f32.mrb[0].mxu0
        %v1558 = vadd.f32 %v1419, %v1557
        %v1559 = vpop.f32.mrb[0].mxu0
        %1560 = vmatprep.mubr.f32.mxu0 0.0
        %1561 = vmatmul.mubr.f32.gmra.mrb[0].mxu0 %v1395
        %v1562 = vpop.f32.mrb[0].mxu0
        %v1563 = vadd.f32 %v1419, %v1562
        %v1564 = vpop.f32.mrb[0].mxu0
        %1565 = vdwg.mxu0
        %v1566 = vmax.f32 %v1488, 0.0
        %v1567 = vmax.f32 %v1493, 0.0
        %v1568 = vmax.f32 %v1498, 0.0
        %v1569 = vmax.f32 %v1503, 0.0
        %v1570 = vmax.f32 %v1508, 0.0
        %v1571 = vmax.f32 %v1513, 0.0
        %v1572 = vmax.f32 %v1518, 0.0
        %v1573 = vmax.f32 %v1523, 0.0
        %v1574 = vmax.f32 %v1528, 0.0
        %v1575 = vmax.f32 %v1533, 0.0
        %v1576 = vmax.f32 %v1538, 0.0
        %v1577 = vmax.f32 %v1543, 0.0
        %v1578 = vmax.f32 %v1548, 0.0
        %v1579 = vmax.f32 %v1553, 0.0
        %v1580 = vmax.f32 %v1558, 0.0
        %v1581 = vmax.f32 %v1563, 0.0
        %v1582 = vld [vmem:[#allocation6] sm:$0xff]
        %v1583 = vld [vmem:[#allocation6 + $0x8] sm:$0xff]
        %v1584 = vld [vmem:[#allocation6 + $0x10] sm:$0xff]
        %v1585 = vld [vmem:[#allocation6 + $0x18] sm:$0xff]
        %v1586 = vld [vmem:[#allocation6 + $0x20] sm:$0xff]
        %v1587 = vld [vmem:[#allocation6 + $0x28] sm:$0xff]
        %v1588 = vld [vmem:[#allocation6 + $0x30] sm:$0xff]
        %v1589 = vld [vmem:[#allocation6 + $0x38] sm:$0xff]
        %v1590 = vld [vmem:[#allocation6 + $0x40] sm:$0xff]
        %v1591 = vld [vmem:[#allocation6 + $0x48] sm:$0xff]
        %v1592 = vld [vmem:[#allocation6 + $0x50] sm:$0xff]
        %v1593 = vld [vmem:[#allocation6 + $0x58] sm:$0xff]
        %v1594 = vld [vmem:[#allocation6 + $0x60] sm:$0xff]
        %v1595 = vld [vmem:[#allocation6 + $0x68] sm:$0xff]
        %v1596 = vld [vmem:[#allocation6 + $0x70] sm:$0xff]
        %v1597 = vld [vmem:[#allocation6 + $0x78] sm:$0xff]
        %v1598 = vld [vmem:[%s12] sm:$0x1]
        %v1600 = vlaneseq
        %v1601 = vshrl.u32 %v1600, 7
        %v1602 = vsub.s32 0, %v1601
        %v1603 = vrot.slane %v1598, %v1602
        %1605 = vmatprep.subr.mxu0 0.0
        %1606 = vmatpush1.msra.mxu0 %v1582
        %1607 = vmatprep.subr.mxu0 0.0
        %1608 = vmatpush1.msra.mxu0 %v1583
        %1609 = vmatprep.subr.mxu0 0.0
        %1610 = vmatpush1.msra.mxu0 %v1584
        %1611 = vmatprep.subr.mxu0 0.0
        %1612 = vmatpush1.msra.mxu0 %v1585
        %1613 = vmatprep.subr.mxu0 0.0
        %1614 = vmatpush1.msra.mxu0 %v1586
        %1615 = vmatprep.subr.mxu0 0.0
        %1616 = vmatpush1.msra.mxu0 %v1587
        %1617 = vmatprep.subr.mxu0 0.0
        %1618 = vmatpush1.msra.mxu0 %v1588
        %1619 = vmatprep.subr.mxu0 0.0
        %1620 = vmatpush1.msra.mxu0 %v1589
        %1621 = vmatprep.subr.mxu0 0.0
        %1622 = vmatpush1.msra.mxu0 %v1590
        %1623 = vmatprep.subr.mxu0 0.0
        %1624 = vmatpush1.msra.mxu0 %v1591
        %1625 = vmatprep.subr.mxu0 0.0
        %1626 = vmatpush1.msra.mxu0 %v1592
        %1627 = vmatprep.subr.mxu0 0.0
        %1628 = vmatpush1.msra.mxu0 %v1593
        %1629 = vmatprep.subr.mxu0 0.0
        %1630 = vmatpush1.msra.mxu0 %v1594
        %1631 = vmatprep.subr.mxu0 0.0
        %1632 = vmatpush1.msra.mxu0 %v1595
        %1633 = vmatprep.subr.mxu0 0.0
        %1634 = vmatpush1.msra.mxu0 %v1596
        %1635 = vmatprep.subr.mxu0 0.0
        %1636 = vmatpush1.msra.mxu0 %v1597
        %1637 = vmatprep.subr.mxu0 0.0
        %1638 = vmatpush1.msra.mxu0 0.0
        %1639 = vmatprep.subr.mxu0 0.0
        %1640 = vmatpush1.msra.mxu0 0.0
        %1641 = vmatprep.subr.mxu0 0.0
        %1642 = vmatpush1.msra.mxu0 0.0
        %1643 = vmatprep.subr.mxu0 0.0
        %1644 = vmatpush1.msra.mxu0 0.0
        %1645 = vmatprep.subr.mxu0 0.0
        %1646 = vmatpush1.msra.mxu0 0.0
        %1647 = vmatprep.subr.mxu0 0.0
        %1648 = vmatpush1.msra.mxu0 0.0
        %1649 = vmatprep.subr.mxu0 0.0
        %1650 = vmatpush1.msra.mxu0 0.0
        %1651 = vmatprep.subr.mxu0 0.0
        %1652 = vmatpush1.msra.mxu0 0.0
        %1653 = vmatprep.subr.mxu0 0.0
        %1654 = vmatpush1.msra.mxu0 0.0
        %1655 = vmatprep.subr.mxu0 0.0
        %1656 = vmatpush1.msra.mxu0 0.0
        %1657 = vmatprep.subr.mxu0 0.0
        %1658 = vmatpush1.msra.mxu0 0.0
        %1659 = vmatprep.subr.mxu0 0.0
        %1660 = vmatpush1.msra.mxu0 0.0
        %1661 = vmatprep.subr.mxu0 0.0
        %1662 = vmatpush1.msra.mxu0 0.0
        %1663 = vmatprep.subr.mxu0 0.0
        %1664 = vmatpush1.msra.mxu0 0.0
        %1665 = vmatprep.subr.mxu0 0.0
        %1666 = vmatpush1.msra.mxu0 0.0
        %1667 = vmatprep.subr.mxu0 0.0
        %1668 = vmatpush1.msra.mxu0 0.0
        %1669 = vmatprep.mubr.f32.mxu0 0.0
        %1670 = vmatmul.mubr.f32.gmra.mrb[0].mxu0 %v1566
        %v1671 = vpop.f32.mrb[0].mxu0
        %v1672 = vadd.f32 %v1603, %v1671
        %v1673 = vpop.f32.mrb[0].mxu0
        %1674 = vmatprep.mubr.f32.mxu0 0.0
        %1675 = vmatmul.mubr.f32.gmra.mrb[0].mxu0 %v1567
        %v1676 = vpop.f32.mrb[0].mxu0
        %v1677 = vadd.f32 %v1603, %v1676
        %v1678 = vpop.f32.mrb[0].mxu0
        %1679 = vmatprep.mubr.f32.mxu0 0.0
        %1680 = vmatmul.mubr.f32.gmra.mrb[0].mxu0 %v1568
        %v1681 = vpop.f32.mrb[0].mxu0
        %v1682 = vadd.f32 %v1603, %v1681
        %v1683 = vpop.f32.mrb[0].mxu0
        %1684 = vmatprep.mubr.f32.mxu0 0.0
        %1685 = vmatmul.mubr.f32.gmra.mrb[0].mxu0 %v1569
        %v1686 = vpop.f32.mrb[0].mxu0
        %v1687 = vadd.f32 %v1603, %v1686
        %v1688 = vpop.f32.mrb[0].mxu0
        %1689 = vmatprep.mubr.f32.mxu0 0.0
        %1690 = vmatmul.mubr.f32.gmra.mrb[0].mxu0 %v1570
        %v1691 = vpop.f32.mrb[0].mxu0
        %v1692 = vadd.f32 %v1603, %v1691
        %v1693 = vpop.f32.mrb[0].mxu0
        %1694 = vmatprep.mubr.f32.mxu0 0.0
        %1695 = vmatmul.mubr.f32.gmra.mrb[0].mxu0 %v1571
        %v1696 = vpop.f32.mrb[0].mxu0
        %v1697 = vadd.f32 %v1603, %v1696
        %v1698 = vpop.f32.mrb[0].mxu0
        %1699 = vmatprep.mubr.f32.mxu0 0.0
        %1700 = vmatmul.mubr.f32.gmra.mrb[0].mxu0 %v1572
        %v1701 = vpop.f32.mrb[0].mxu0
        %v1702 = vadd.f32 %v1603, %v1701
        %v1703 = vpop.f32.mrb[0].mxu0
        %1704 = vmatprep.mubr.f32.mxu0 0.0
        %1705 = vmatmul.mubr.f32.gmra.mrb[0].mxu0 %v1573
        %v1706 = vpop.f32.mrb[0].mxu0
        %v1707 = vadd.f32 %v1603, %v1706
        %v1708 = vpop.f32.mrb[0].mxu0
        %1709 = vmatprep.mubr.f32.mxu0 0.0
        %1710 = vmatmul.mubr.f32.gmra.mrb[0].mxu0 %v1574
        %v1711 = vpop.f32.mrb[0].mxu0
        %v1712 = vadd.f32 %v1603, %v1711
        %v1713 = vpop.f32.mrb[0].mxu0
        %1714 = vmatprep.mubr.f32.mxu0 0.0
        %1715 = vmatmul.mubr.f32.gmra.mrb[0].mxu0 %v1575
        %v1716 = vpop.f32.mrb[0].mxu0
        %v1717 = vadd.f32 %v1603, %v1716
        %v1718 = vpop.f32.mrb[0].mxu0
        %1719 = vmatprep.mubr.f32.mxu0 0.0
        %1720 = vmatmul.mubr.f32.gmra.mrb[0].mxu0 %v1576
        %v1721 = vpop.f32.mrb[0].mxu0
        %v1722 = vadd.f32 %v1603, %v1721
        %v1723 = vpop.f32.mrb[0].mxu0
        %1724 = vmatprep.mubr.f32.mxu0 0.0
        %1725 = vmatmul.mubr.f32.gmra.mrb[0].mxu0 %v1577
        %v1726 = vpop.f32.mrb[0].mxu0
        %v1727 = vadd.f32 %v1603, %v1726
        %v1728 = vpop.f32.mrb[0].mxu0
        %1729 = vmatprep.mubr.f32.mxu0 0.0
        %1730 = vmatmul.mubr.f32.gmra.mrb[0].mxu0 %v1578
        %v1731 = vpop.f32.mrb[0].mxu0
        %v1732 = vadd.f32 %v1603, %v1731
        %v1733 = vpop.f32.mrb[0].mxu0
        %1734 = vmatprep.mubr.f32.mxu0 0.0
        %1735 = vmatmul.mubr.f32.gmra.mrb[0].mxu0 %v1579
        %v1736 = vpop.f32.mrb[0].mxu0
        %v1737 = vadd.f32 %v1603, %v1736
        %v1738 = vpop.f32.mrb[0].mxu0
        %1739 = vmatprep.mubr.f32.mxu0 0.0
        %1740 = vmatmul.mubr.f32.gmra.mrb[0].mxu0 %v1580
        %v1741 = vpop.f32.mrb[0].mxu0
        %v1742 = vadd.f32 %v1603, %v1741
        %v1743 = vpop.f32.mrb[0].mxu0
        %1744 = vmatprep.mubr.f32.mxu0 0.0
        %1745 = vmatmul.mubr.f32.gmra.mrb[0].mxu0 %v1581
        %v1746 = vpop.f32.mrb[0].mxu0
        %v1747 = vadd.f32 %v1603, %v1746
        %v1748 = vpop.f32.mrb[0].mxu0
        %1749 = vdwg.mxu0
        %v1750 = vmax.f32 %v1672, 0.0
        %v1751 = vmax.f32 %v1677, 0.0
        %v1752 = vmax.f32 %v1682, 0.0
        %v1753 = vmax.f32 %v1687, 0.0
        %v1754 = vmax.f32 %v1692, 0.0
        %v1755 = vmax.f32 %v1697, 0.0
        %v1756 = vmax.f32 %v1702, 0.0
        %v1757 = vmax.f32 %v1707, 0.0
        %v1758 = vmax.f32 %v1712, 0.0
        %v1759 = vmax.f32 %v1717, 0.0
        %v1760 = vmax.f32 %v1722, 0.0
        %v1761 = vmax.f32 %v1727, 0.0
        %v1762 = vmax.f32 %v1732, 0.0
        %v1763 = vmax.f32 %v1737, 0.0
        %v1764 = vmax.f32 %v1742, 0.0
        %v1765 = vmax.f32 %v1747, 0.0
        %v1766 = vld [vmem:[#allocation7] sm:$0xff]
        %v1767 = vld [vmem:[#allocation7 + $0x8] sm:$0xff]
        %v1768 = vld [vmem:[#allocation7 + $0x10] sm:$0xff]
        %v1769 = vld [vmem:[#allocation7 + $0x18] sm:$0xff]
        %v1770 = vld [vmem:[#allocation7 + $0x20] sm:$0xff]
        %v1771 = vld [vmem:[#allocation7 + $0x28] sm:$0xff]
        %v1772 = vld [vmem:[#allocation7 + $0x30] sm:$0xff]
        %v1773 = vld [vmem:[#allocation7 + $0x38] sm:$0xff]
        %v1774 = vld [vmem:[#allocation7 + $0x40] sm:$0xff]
        %v1775 = vld [vmem:[#allocation7 + $0x48] sm:$0xff]
        %v1776 = vld [vmem:[#allocation7 + $0x50] sm:$0xff]
        %v1777 = vld [vmem:[#allocation7 + $0x58] sm:$0xff]
        %v1778 = vld [vmem:[#allocation7 + $0x60] sm:$0xff]
        %v1779 = vld [vmem:[#allocation7 + $0x68] sm:$0xff]
        %v1780 = vld [vmem:[#allocation7 + $0x70] sm:$0xff]
        %v1781 = vld [vmem:[#allocation7 + $0x78] sm:$0xff]
        %v1782 = vld [vmem:[%s14] sm:$0x1]
        %v1784 = vlaneseq
        %v1785 = vshrl.u32 %v1784, 7
        %v1786 = vsub.s32 0, %v1785
        %v1787 = vrot.slane %v1782, %v1786
        %1789 = vmatprep.subr.mxu0 0.0
        %1790 = vmatpush1.msra.mxu0 %v1766
        %1791 = vmatprep.subr.mxu0 0.0
        %1792 = vmatpush1.msra.mxu0 %v1767
        %1793 = vmatprep.subr.mxu0 0.0
        %1794 = vmatpush1.msra.mxu0 %v1768
        %1795 = vmatprep.subr.mxu0 0.0
        %1796 = vmatpush1.msra.mxu0 %v1769
        %1797 = vmatprep.subr.mxu0 0.0
        %1798 = vmatpush1.msra.mxu0 %v1770
        %1799 = vmatprep.subr.mxu0 0.0
        %1800 = vmatpush1.msra.mxu0 %v1771
        %1801 = vmatprep.subr.mxu0 0.0
        %1802 = vmatpush1.msra.mxu0 %v1772
        %1803 = vmatprep.subr.mxu0 0.0
        %1804 = vmatpush1.msra.mxu0 %v1773
        %1805 = vmatprep.subr.mxu0 0.0
        %1806 = vmatpush1.msra.mxu0 %v1774
        %1807 = vmatprep.subr.mxu0 0.0
        %1808 = vmatpush1.msra.mxu0 %v1775
        %1809 = vmatprep.subr.mxu0 0.0
        %1810 = vmatpush1.msra.mxu0 %v1776
        %1811 = vmatprep.subr.mxu0 0.0
        %1812 = vmatpush1.msra.mxu0 %v1777
        %1813 = vmatprep.subr.mxu0 0.0
        %1814 = vmatpush1.msra.mxu0 %v1778
        %1815 = vmatprep.subr.mxu0 0.0
        %1816 = vmatpush1.msra.mxu0 %v1779
        %1817 = vmatprep.subr.mxu0 0.0
        %1818 = vmatpush1.msra.mxu0 %v1780
        %1819 = vmatprep.subr.mxu0 0.0
        %1820 = vmatpush1.msra.mxu0 %v1781
        %1821 = vmatprep.subr.mxu0 0.0
        %1822 = vmatpush1.msra.mxu0 0.0
        %1823 = vmatprep.subr.mxu0 0.0
        %1824 = vmatpush1.msra.mxu0 0.0
        %1825 = vmatprep.subr.mxu0 0.0
        %1826 = vmatpush1.msra.mxu0 0.0
        %1827 = vmatprep.subr.mxu0 0.0
        %1828 = vmatpush1.msra.mxu0 0.0
        %1829 = vmatprep.subr.mxu0 0.0
        %1830 = vmatpush1.msra.mxu0 0.0
        %1831 = vmatprep.subr.mxu0 0.0
        %1832 = vmatpush1.msra.mxu0 0.0
        %1833 = vmatprep.subr.mxu0 0.0
        %1834 = vmatpush1.msra.mxu0 0.0
        %1835 = vmatprep.subr.mxu0 0.0
        %1836 = vmatpush1.msra.mxu0 0.0
        %1837 = vmatprep.subr.mxu0 0.0
        %1838 = vmatpush1.msra.mxu0 0.0
        %1839 = vmatprep.subr.mxu0 0.0
        %1840 = vmatpush1.msra.mxu0 0.0
        %1841 = vmatprep.subr.mxu0 0.0
        %1842 = vmatpush1.msra.mxu0 0.0
        %1843 = vmatprep.subr.mxu0 0.0
        %1844 = vmatpush1.msra.mxu0 0.0
        %1845 = vmatprep.subr.mxu0 0.0
        %1846 = vmatpush1.msra.mxu0 0.0
        %1847 = vmatprep.subr.mxu0 0.0
        %1848 = vmatpush1.msra.mxu0 0.0
        %1849 = vmatprep.subr.mxu0 0.0
        %1850 = vmatpush1.msra.mxu0 0.0
        %1851 = vmatprep.subr.mxu0 0.0
        %1852 = vmatpush1.msra.mxu0 0.0
        %1853 = vmatprep.mubr.f32.mxu0 0.0
        %1854 = vmatmul.mubr.f32.gmra.mrb[0].mxu0 %v1750
        %v1855 = vpop.f32.mrb[0].mxu0
        %v1856 = vadd.f32 %v1787, %v1855
        %v1857 = vpop.f32.mrb[0].mxu0
        %1858 = vmatprep.mubr.f32.mxu0 0.0
        %1859 = vmatmul.mubr.f32.gmra.mrb[0].mxu0 %v1751
        %v1860 = vpop.f32.mrb[0].mxu0
        %v1861 = vadd.f32 %v1787, %v1860
        %v1862 = vpop.f32.mrb[0].mxu0
        %1863 = vmatprep.mubr.f32.mxu0 0.0
        %1864 = vmatmul.mubr.f32.gmra.mrb[0].mxu0 %v1752
        %v1865 = vpop.f32.mrb[0].mxu0
        %v1866 = vadd.f32 %v1787, %v1865
        %v1867 = vpop.f32.mrb[0].mxu0
        %1868 = vmatprep.mubr.f32.mxu0 0.0
        %1869 = vmatmul.mubr.f32.gmra.mrb[0].mxu0 %v1753
        %v1870 = vpop.f32.mrb[0].mxu0
        %v1871 = vadd.f32 %v1787, %v1870
        %v1872 = vpop.f32.mrb[0].mxu0
        %1873 = vmatprep.mubr.f32.mxu0 0.0
        %1874 = vmatmul.mubr.f32.gmra.mrb[0].mxu0 %v1754
        %v1875 = vpop.f32.mrb[0].mxu0
        %v1876 = vadd.f32 %v1787, %v1875
        %v1877 = vpop.f32.mrb[0].mxu0
        %1878 = vmatprep.mubr.f32.mxu0 0.0
        %1879 = vmatmul.mubr.f32.gmra.mrb[0].mxu0 %v1755
        %v1880 = vpop.f32.mrb[0].mxu0
        %v1881 = vadd.f32 %v1787, %v1880
        %v1882 = vpop.f32.mrb[0].mxu0
        %1883 = vmatprep.mubr.f32.mxu0 0.0
        %1884 = vmatmul.mubr.f32.gmra.mrb[0].mxu0 %v1756
        %v1885 = vpop.f32.mrb[0].mxu0
        %v1886 = vadd.f32 %v1787, %v1885
        %v1887 = vpop.f32.mrb[0].mxu0
        %1888 = vmatprep.mubr.f32.mxu0 0.0
        %1889 = vmatmul.mubr.f32.gmra.mrb[0].mxu0 %v1757
        %v1890 = vpop.f32.mrb[0].mxu0
        %v1891 = vadd.f32 %v1787, %v1890
        %v1892 = vpop.f32.mrb[0].mxu0
        %1893 = vmatprep.mubr.f32.mxu0 0.0
        %1894 = vmatmul.mubr.f32.gmra.mrb[0].mxu0 %v1758
        %v1895 = vpop.f32.mrb[0].mxu0
        %v1896 = vadd.f32 %v1787, %v1895
        %v1897 = vpop.f32.mrb[0].mxu0
        %1898 = vmatprep.mubr.f32.mxu0 0.0
        %1899 = vmatmul.mubr.f32.gmra.mrb[0].mxu0 %v1759
        %v1900 = vpop.f32.mrb[0].mxu0
        %v1901 = vadd.f32 %v1787, %v1900
        %v1902 = vpop.f32.mrb[0].mxu0
        %1903 = vmatprep.mubr.f32.mxu0 0.0
        %1904 = vmatmul.mubr.f32.gmra.mrb[0].mxu0 %v1760
        %v1905 = vpop.f32.mrb[0].mxu0
        %v1906 = vadd.f32 %v1787, %v1905
        %v1907 = vpop.f32.mrb[0].mxu0
        %1908 = vmatprep.mubr.f32.mxu0 0.0
        %1909 = vmatmul.mubr.f32.gmra.mrb[0].mxu0 %v1761
        %v1910 = vpop.f32.mrb[0].mxu0
        %v1911 = vadd.f32 %v1787, %v1910
        %v1912 = vpop.f32.mrb[0].mxu0
        %1913 = vmatprep.mubr.f32.mxu0 0.0
        %1914 = vmatmul.mubr.f32.gmra.mrb[0].mxu0 %v1762
        %v1915 = vpop.f32.mrb[0].mxu0
        %v1916 = vadd.f32 %v1787, %v1915
        %v1917 = vpop.f32.mrb[0].mxu0
        %1918 = vmatprep.mubr.f32.mxu0 0.0
        %1919 = vmatmul.mubr.f32.gmra.mrb[0].mxu0 %v1763
        %v1920 = vpop.f32.mrb[0].mxu0
        %v1921 = vadd.f32 %v1787, %v1920
        %v1922 = vpop.f32.mrb[0].mxu0
        %1923 = vmatprep.mubr.f32.mxu0 0.0
        %1924 = vmatmul.mubr.f32.gmra.mrb[0].mxu0 %v1764
        %v1925 = vpop.f32.mrb[0].mxu0
        %v1926 = vadd.f32 %v1787, %v1925
        %v1927 = vpop.f32.mrb[0].mxu0
        %1928 = vmatprep.mubr.f32.mxu0 0.0
        %1929 = vmatmul.mubr.f32.gmra.mrb[0].mxu0 %v1765
        %v1930 = vpop.f32.mrb[0].mxu0
        %v1931 = vadd.f32 %v1787, %v1930
        %v1932 = vpop.f32.mrb[0].mxu0
        %1933 = vdwg.mxu0
        %v1934 = vmax.f32 %v1856, 0.0
        %v1935 = vmax.f32 %v1861, 0.0
        %v1936 = vmax.f32 %v1866, 0.0
        %v1937 = vmax.f32 %v1871, 0.0
        %v1938 = vmax.f32 %v1876, 0.0
        %v1939 = vmax.f32 %v1881, 0.0
        %v1940 = vmax.f32 %v1886, 0.0
        %v1941 = vmax.f32 %v1891, 0.0
        %v1942 = vmax.f32 %v1896, 0.0
        %v1943 = vmax.f32 %v1901, 0.0
        %v1944 = vmax.f32 %v1906, 0.0
        %v1945 = vmax.f32 %v1911, 0.0
        %v1946 = vmax.f32 %v1916, 0.0
        %v1947 = vmax.f32 %v1921, 0.0
        %v1948 = vmax.f32 %v1926, 0.0
        %v1949 = vmax.f32 %v1931, 0.0
        %v1950 = vld [vmem:[%s15] sm:$0xff]
        %v1951 = vld [vmem:[%s15 + $0x8] sm:$0xff]
        %v1952 = vld [vmem:[%s15 + $0x10] sm:$0xff]
        %v1953 = vld [vmem:[%s15 + $0x18] sm:$0xff]
        %v1954 = vld [vmem:[%s15 + $0x20] sm:$0xff]
        %v1955 = vld [vmem:[%s15 + $0x28] sm:$0xff]
        %v1956 = vld [vmem:[%s15 + $0x30] sm:$0xff]
        %v1957 = vld [vmem:[%s15 + $0x38] sm:$0xff]
        %v1958 = vld [vmem:[%s15 + $0x40] sm:$0xff]
        %v1959 = vld [vmem:[%s15 + $0x48] sm:$0xff]
        %v1960 = vld [vmem:[%s15 + $0x50] sm:$0xff]
        %v1961 = vld [vmem:[%s15 + $0x58] sm:$0xff]
        %v1962 = vld [vmem:[%s15 + $0x60] sm:$0xff]
        %v1963 = vld [vmem:[%s15 + $0x68] sm:$0xff]
        %v1964 = vld [vmem:[%s15 + $0x70] sm:$0xff]
        %v1965 = vld [vmem:[%s15 + $0x78] sm:$0xff]
        %v1966 = vld [vmem:[%s16] sm:$0x1]
        %v1968 = vlaneseq
        %v1969 = vshrl.u32 %v1968, 7
        %v1970 = vsub.s32 0, %v1969
        %v1971 = vrot.slane %v1966, %v1970
        %1973 = vmatprep.subr.mxu0 0.0
        %1974 = vmatpush1.msra.mxu0 %v1950
        %1975 = vmatprep.subr.mxu0 0.0
        %1976 = vmatpush1.msra.mxu0 %v1951
        %1977 = vmatprep.subr.mxu0 0.0
        %1978 = vmatpush1.msra.mxu0 %v1952
        %1979 = vmatprep.subr.mxu0 0.0
        %1980 = vmatpush1.msra.mxu0 %v1953
        %1981 = vmatprep.subr.mxu0 0.0
        %1982 = vmatpush1.msra.mxu0 %v1954
        %1983 = vmatprep.subr.mxu0 0.0
        %1984 = vmatpush1.msra.mxu0 %v1955
        %1985 = vmatprep.subr.mxu0 0.0
        %1986 = vmatpush1.msra.mxu0 %v1956
        %1987 = vmatprep.subr.mxu0 0.0
        %1988 = vmatpush1.msra.mxu0 %v1957
        %1989 = vmatprep.subr.mxu0 0.0
        %1990 = vmatpush1.msra.mxu0 %v1958
        %1991 = vmatprep.subr.mxu0 0.0
        %1992 = vmatpush1.msra.mxu0 %v1959
        %1993 = vmatprep.subr.mxu0 0.0
        %1994 = vmatpush1.msra.mxu0 %v1960
        %1995 = vmatprep.subr.mxu0 0.0
        %1996 = vmatpush1.msra.mxu0 %v1961
        %1997 = vmatprep.subr.mxu0 0.0
        %1998 = vmatpush1.msra.mxu0 %v1962
        %1999 = vmatprep.subr.mxu0 0.0
        %2000 = vmatpush1.msra.mxu0 %v1963
        %2001 = vmatprep.subr.mxu0 0.0
        %2002 = vmatpush1.msra.mxu0 %v1964
        %2003 = vmatprep.subr.mxu0 0.0
        %2004 = vmatpush1.msra.mxu0 %v1965
        %2005 = vmatprep.subr.mxu0 0.0
        %2006 = vmatpush1.msra.mxu0 0.0
        %2007 = vmatprep.subr.mxu0 0.0
        %2008 = vmatpush1.msra.mxu0 0.0
        %2009 = vmatprep.subr.mxu0 0.0
        %2010 = vmatpush1.msra.mxu0 0.0
        %2011 = vmatprep.subr.mxu0 0.0
        %2012 = vmatpush1.msra.mxu0 0.0
        %2013 = vmatprep.subr.mxu0 0.0
        %2014 = vmatpush1.msra.mxu0 0.0
        %2015 = vmatprep.subr.mxu0 0.0
        %2016 = vmatpush1.msra.mxu0 0.0
        %2017 = vmatprep.subr.mxu0 0.0
        %2018 = vmatpush1.msra.mxu0 0.0
        %2019 = vmatprep.subr.mxu0 0.0
        %2020 = vmatpush1.msra.mxu0 0.0
        %2021 = vmatprep.subr.mxu0 0.0
        %2022 = vmatpush1.msra.mxu0 0.0
        %2023 = vmatprep.subr.mxu0 0.0
        %2024 = vmatpush1.msra.mxu0 0.0
        %2025 = vmatprep.subr.mxu0 0.0
        %2026 = vmatpush1.msra.mxu0 0.0
        %2027 = vmatprep.subr.mxu0 0.0
        %2028 = vmatpush1.msra.mxu0 0.0
        %2029 = vmatprep.subr.mxu0 0.0
        %2030 = vmatpush1.msra.mxu0 0.0
        %2031 = vmatprep.subr.mxu0 0.0
        %2032 = vmatpush1.msra.mxu0 0.0
        %2033 = vmatprep.subr.mxu0 0.0
        %2034 = vmatpush1.msra.mxu0 0.0
        %2035 = vmatprep.subr.mxu0 0.0
        %2036 = vmatpush1.msra.mxu0 0.0
        %2037 = vmatprep.mubr.f32.mxu0 0.0
        %2038 = vmatmul.mubr.f32.gmra.mrb[0].mxu0 %v1934
        %v2039 = vpop.f32.mrb[0].mxu0
        %v2040 = vadd.f32 %v1971, %v2039
        %v2041 = vpop.f32.mrb[0].mxu0
        %2042 = vmatprep.mubr.f32.mxu0 0.0
        %2043 = vmatmul.mubr.f32.gmra.mrb[0].mxu0 %v1935
        %v2044 = vpop.f32.mrb[0].mxu0
        %v2045 = vadd.f32 %v1971, %v2044
        %v2046 = vpop.f32.mrb[0].mxu0
        %2047 = vmatprep.mubr.f32.mxu0 0.0
        %2048 = vmatmul.mubr.f32.gmra.mrb[0].mxu0 %v1936
        %v2049 = vpop.f32.mrb[0].mxu0
        %v2050 = vadd.f32 %v1971, %v2049
        %v2051 = vpop.f32.mrb[0].mxu0
        %2052 = vmatprep.mubr.f32.mxu0 0.0
        %2053 = vmatmul.mubr.f32.gmra.mrb[0].mxu0 %v1937
        %v2054 = vpop.f32.mrb[0].mxu0
        %v2055 = vadd.f32 %v1971, %v2054
        %v2056 = vpop.f32.mrb[0].mxu0
        %2057 = vmatprep.mubr.f32.mxu0 0.0
        %2058 = vmatmul.mubr.f32.gmra.mrb[0].mxu0 %v1938
        %v2059 = vpop.f32.mrb[0].mxu0
        %v2060 = vadd.f32 %v1971, %v2059
        %v2061 = vpop.f32.mrb[0].mxu0
        %2062 = vmatprep.mubr.f32.mxu0 0.0
        %2063 = vmatmul.mubr.f32.gmra.mrb[0].mxu0 %v1939
        %v2064 = vpop.f32.mrb[0].mxu0
        %v2065 = vadd.f32 %v1971, %v2064
        %v2066 = vpop.f32.mrb[0].mxu0
        %2067 = vmatprep.mubr.f32.mxu0 0.0
        %2068 = vmatmul.mubr.f32.gmra.mrb[0].mxu0 %v1940
        %v2069 = vpop.f32.mrb[0].mxu0
        %v2070 = vadd.f32 %v1971, %v2069
        %v2071 = vpop.f32.mrb[0].mxu0
        %2072 = vmatprep.mubr.f32.mxu0 0.0
        %2073 = vmatmul.mubr.f32.gmra.mrb[0].mxu0 %v1941
        %v2074 = vpop.f32.mrb[0].mxu0
        %v2075 = vadd.f32 %v1971, %v2074
        %v2076 = vpop.f32.mrb[0].mxu0
        %2077 = vmatprep.mubr.f32.mxu0 0.0
        %2078 = vmatmul.mubr.f32.gmra.mrb[0].mxu0 %v1942
        %v2079 = vpop.f32.mrb[0].mxu0
        %v2080 = vadd.f32 %v1971, %v2079
        %v2081 = vpop.f32.mrb[0].mxu0
        %2082 = vmatprep.mubr.f32.mxu0 0.0
        %2083 = vmatmul.mubr.f32.gmra.mrb[0].mxu0 %v1943
        %v2084 = vpop.f32.mrb[0].mxu0
        %v2085 = vadd.f32 %v1971, %v2084
        %v2086 = vpop.f32.mrb[0].mxu0
        %2087 = vmatprep.mubr.f32.mxu0 0.0
        %2088 = vmatmul.mubr.f32.gmra.mrb[0].mxu0 %v1944
        %v2089 = vpop.f32.mrb[0].mxu0
        %v2090 = vadd.f32 %v1971, %v2089
        %v2091 = vpop.f32.mrb[0].mxu0
        %2092 = vmatprep.mubr.f32.mxu0 0.0
        %2093 = vmatmul.mubr.f32.gmra.mrb[0].mxu0 %v1945
        %v2094 = vpop.f32.mrb[0].mxu0
        %v2095 = vadd.f32 %v1971, %v2094
        %v2096 = vpop.f32.mrb[0].mxu0
        %2097 = vmatprep.mubr.f32.mxu0 0.0
        %2098 = vmatmul.mubr.f32.gmra.mrb[0].mxu0 %v1946
        %v2099 = vpop.f32.mrb[0].mxu0
        %v2100 = vadd.f32 %v1971, %v2099
        %v2101 = vpop.f32.mrb[0].mxu0
        %2102 = vmatprep.mubr.f32.mxu0 0.0
        %2103 = vmatmul.mubr.f32.gmra.mrb[0].mxu0 %v1947
        %v2104 = vpop.f32.mrb[0].mxu0
        %v2105 = vadd.f32 %v1971, %v2104
        %v2106 = vpop.f32.mrb[0].mxu0
        %2107 = vmatprep.mubr.f32.mxu0 0.0
        %2108 = vmatmul.mubr.f32.gmra.mrb[0].mxu0 %v1948
        %v2109 = vpop.f32.mrb[0].mxu0
        %v2110 = vadd.f32 %v1971, %v2109
        %v2111 = vpop.f32.mrb[0].mxu0
        %2112 = vmatprep.mubr.f32.mxu0 0.0
        %2113 = vmatmul.mubr.f32.gmra.mrb[0].mxu0 %v1949
        %v2114 = vpop.f32.mrb[0].mxu0
        %v2115 = vadd.f32 %v1971, %v2114
        %v2116 = vpop.f32.mrb[0].mxu0
        %2117 = vdwg.mxu0
        %v2118 = vtanh.pop %v2040
        %v2119 = vtanh.pop %v2045
        %v2120 = vtanh.pop %v2050
        %v2121 = vtanh.pop %v2055
        %v2122 = vtanh.pop %v2060
        %v2123 = vtanh.pop %v2065
        %v2124 = vtanh.pop %v2070
        %v2125 = vtanh.pop %v2075
        %v2126 = vtanh.pop %v2080
        %v2127 = vtanh.pop %v2085
        %v2128 = vtanh.pop %v2090
        %v2129 = vtanh.pop %v2095
        %v2130 = vtanh.pop %v2100
        %v2131 = vtanh.pop %v2105
        %v2132 = vtanh.pop %v2110
        %v2133 = vtanh.pop %v2115
        %2134 = vst.msk [vmem:[%s609] sm:$0xff] %vm652, %v2118
        %2135 = vst.msk [vmem:[%s609 + $0x8] sm:$0xff] %vm652, %v2119
        %2136 = vst.msk [vmem:[%s609 + $0x10] sm:$0xff] %vm652, %v2120
        %2137 = vst.msk [vmem:[%s609 + $0x18] sm:$0xff] %vm652, %v2121
        %2138 = vst.msk [vmem:[%s609 + $0x20] sm:$0xff] %vm652, %v2122
        %2139 = vst.msk [vmem:[%s609 + $0x28] sm:$0xff] %vm652, %v2123
        %2140 = vst.msk [vmem:[%s609 + $0x30] sm:$0xff] %vm652, %v2124
        %2141 = vst.msk [vmem:[%s609 + $0x38] sm:$0xff] %vm652, %v2125
        %2142 = vst.msk [vmem:[%s609 + $0x40] sm:$0xff] %vm652, %v2126
        %2143 = vst.msk [vmem:[%s609 + $0x48] sm:$0xff] %vm652, %v2127
        %2144 = vst.msk [vmem:[%s609 + $0x50] sm:$0xff] %vm652, %v2128
        %2145 = vst.msk [vmem:[%s609 + $0x58] sm:$0xff] %vm652, %v2129
        %2146 = vst.msk [vmem:[%s609 + $0x60] sm:$0xff] %vm652, %v2130
        %2147 = vst.msk [vmem:[%s609 + $0x68] sm:$0xff] %vm652, %v2131
        %2148 = vst.msk [vmem:[%s609 + $0x70] sm:$0xff] %vm652, %v2132
        %2149 = vst.msk [vmem:[%s609 + $0x78] sm:$0xff] %vm652, %v2133
        %s2150 = smul.u32 16, %s31
        %p2151 = scmp.lt.s32.totalorder %s2150, 31
        %s2152 = scalar_select %p2151, %s2150, 31
        %s2153 = smul.addr %s2152, 8
        %s2154 = scalar_lea.vmem %s17, %s2153
        // Predicated region
        $region105: #{tpu_custom_call.1} parent=87 // pred_check
          %p2155 = pneg %p411
        $region106: #{tpu_custom_call.1} parent=87 // pred_check_branch
          %2157 = sbr.rel (%p2155) target = $region108
        $region107: #{tpu_custom_call.1} parent=87 // pred_region
          %s2158 = smul.u32 16, %s31
        $region108: #{tpu_custom_call.1} parent=87 // pred_fallthru
          _
      $region88: #{tpu_custom_call.1} parent=5 // pred_fallthru
        _
      %p2159 = scmp.le.s32.totalorder 2, %s26
      // Predicated region
      $region109: #{tpu_custom_call.1} parent=5 // pred_check
        %p2160 = pneg %p2159
      $region110: #{tpu_custom_call.1} parent=5 // pred_check_branch
        %2162 = sbr.rel (%p2160) target = $region112
      $region111: #{tpu_custom_call.1} parent=5 // pred_region
        %s2163 = ssub.s32 %s26, 2
        // Predicated region
        $region113: #{tpu_custom_call.1} parent=111 // pred_check
          %p2164 = pneg %p417
        $region114: #{tpu_custom_call.1} parent=111 // pred_check_branch
          %2166 = sbr.rel (%p2164) target = $region116
        $region115: #{tpu_custom_call.1} parent=111 // pred_region
          %s2167 = smul.u32 16, %s32
          %p2168 = scmp.lt.s32.totalorder %s2167, 31
          %s2169 = scalar_select %p2168, %s2167, 31
          %s2170 = smul.addr %s2169, 8
          %s2171 = scalar_lea.vmem %s17, %s2170
        $region116: #{tpu_custom_call.1} parent=111 // pred_fallthru
          _
      $region112: #{tpu_custom_call.1} parent=5 // pred_fallthru
        _
    $region6: #{tpu_custom_call.1} parent=1 // loop_footer
      %s30 = sadd.s32 1, %s26
    $region7: #{tpu_custom_call.1} parent=1 // loop_footer_branch
      %25 = sbr.rel target = $region3
    $region8: #{tpu_custom_call.1} parent=1 // loop_exit
      _
    %2172 = vsyncpa [#allocation3], 1
    %s2173 = scalar_lea.sflag [#allocation3], 1
    %2174 = vsyncpa %s2173, 1
    %2175 = vsyncpa [#allocation5], 1
    %2176 = vsyncpa [#allocation8], 1

</llo_original>
